<compile_context>
chip_gen: v6e
topology: v6e:2x2x1
jax: 0.10.0
libtpu: 0.0.40
codegen_flags: <defaults>
</compile_context>

<pallas_src>
import functools

import jax
import jax.numpy as jnp
from jax.experimental import pallas as pl
from jax.experimental.pallas import tpu as pltpu

MAX_BLOCK_B = 2048  # rows per batch tile cap (per-tile VMEM stays tiny)


def _round_up(n, m):
    return ((n + m - 1) // m) * m


def _num_tensorcores():
    """Best-effort TC-per-chip detection (v7x has 2 TCs; v5e/v6e have 1)."""
    try:
        kind = (getattr(jax.devices()[0], "device_kind", "") or "").lower()
        if "v7" in kind:
            return 2
    except Exception:
        pass
    return 1


def _vmem_limit_bytes():
    """Generation-aware VMEM limit with ~25% headroom; safe fallback."""
    try:
        cap = int(pltpu.get_tpu_info().vmem_capacity_bytes)
    except Exception:
        cap = 64 * 1024 * 1024  # v7x physical (the smallest) -> conservative
    return max(16 * 1024 * 1024, (cap * 3) // 4)


def _pick_block_b(B, num_tc):
    """Batch tile size.

    1-TC chips (v5e/v6e): one grid step (block_b == B) up to MAX_BLOCK_B —
    splitting only adds ~0.35us/step of grid overhead with no parallelism.
    v7x (2 TCs): even tile count so neither core idles on the last tile.
    """
    if B <= 8:
        return B
    if num_tc <= 1:
        return B if B <= MAX_BLOCK_B else MAX_BLOCK_B
    # v7x: smallest even tile count whose tiles fit under the cap.
    n_tiles = 2
    while -(-B // n_tiles) > MAX_BLOCK_B:
        n_tiles += 2
    return _round_up(-(-B // n_tiles), 8)


def _mlp_kernel(x_ref,
                w1_ref, b1_ref,
                w2_ref, b2_ref,
                w3_ref, b3_ref,
                w4_ref, b4_ref,
                w5_ref, b5_ref,
                o_ref):
    # bf16 operands drive the MXU with f32 accumulation; bias-add + ReLU run
    # in f32 on the VPU (portable to v5e, which lacks bf16 VPU ops), then the
    # activations are rounded back to bf16 for the next matmul.
    h = x_ref[...].astype(jnp.bfloat16)

    h = jnp.dot(h, w1_ref[...], preferred_element_type=jnp.float32) + b1_ref[...]
    h = jnp.maximum(h, 0.0).astype(jnp.bfloat16)

    h = jnp.dot(h, w2_ref[...], preferred_element_type=jnp.float32) + b2_ref[...]
    h = jnp.maximum(h, 0.0).astype(jnp.bfloat16)

    h = jnp.dot(h, w3_ref[...], preferred_element_type=jnp.float32) + b3_ref[...]
    # Dropout(p=0.1): identity in eval mode.
    # TODO(synk): training-mode dropout would use pltpu.prng_seed + prng_random_bits.
    h = jnp.maximum(h, 0.0).astype(jnp.bfloat16)

    h = jnp.dot(h, w4_ref[...], preferred_element_type=jnp.float32) + b4_ref[...]
    h = jnp.maximum(h, 0.0).astype(jnp.bfloat16)

    out = jnp.dot(h, w5_ref[...], preferred_element_type=jnp.float32) + b5_ref[...]
    o_ref[...] = out.astype(o_ref.dtype)


@functools.partial(jax.jit, static_argnames=("block_b",))
def simple_mlp1(x, flat_params, block_b=None):
    """Fused forward pass.

    x:           [B, input_size] f32
    flat_params: [W1, b1, ..., W5, b5] as produced by prepare_params():
                 Wi [in_i, out_i] bf16, bi [1, out_i] f32.
    """
    B, in_dim = x.shape
    out_dim = flat_params[-2].shape[1]

    if block_b is None:
        block_b = _pick_block_b(B, _num_tensorcores())

    # x: unpadded; last dim == full array dim, so any in_dim is legal.
    in_specs = [pl.BlockSpec((block_b, in_dim), lambda i: (i, 0))]
    for p in flat_params:
        # Grid-invariant operands: constant block index -> DMA'd once, reused
        # across every batch tile.
        in_specs.append(pl.BlockSpec(p.shape, lambda i: (0, 0)))

    # True-width output: no padded writeback, no wrapper slice.
    out_specs = pl.BlockSpec((block_b, out_dim), lambda i: (i, 0))

    # NOTE: if B % block_b != 0, the last tile reads a few out-of-bounds input
    # rows; rows are independent and output writes are bounded, so results for
    # valid rows are unaffected.
    return pl.pallas_call(
        _mlp_kernel,
        out_shape=jax.ShapeDtypeStruct((B, out_dim), jnp.float32),
        grid_spec=pltpu.PrefetchScalarGridSpec(
            num_scalar_prefetch=0,
            grid=(pl.cdiv(B, block_b),),
            in_specs=in_specs,
            out_specs=out_specs,
        ),
        compiler_params=pltpu.CompilerParams(
            dimension_semantics=("parallel",),  # batch tiles shard across TCs on v7x
            vmem_limit_bytes=_vmem_limit_bytes(),
        ),
    )(x, *flat_params)


def init_params(key, input_size, hid1, hid2, out):
    """f32 params matching SimpleMLP1's Linear layers; weights pre-transposed
    to [in_features, out_features], biases [1, out_features]."""
    dims = [(input_size, hid1), (hid1, hid1), (hid1, hid2), (hid2, hid2), (hid2, out)]
    params = []
    for (fan_in, fan_out) in dims:
        key, kw, kb = jax.random.split(key, 3)
        bound = 1.0 / jnp.sqrt(fan_in)  # PyTorch Linear default init range
        w = jax.random.uniform(kw, (fan_in, fan_out), jnp.float32, -bound, bound)
        b = jax.random.uniform(kb, (1, fan_out), jnp.float32, -bound, bound)
        params.append((w, b))
    return params


def prepare_params(params):
    """One-time (outside-jit) conversion to the kernel's operand layout:
    bf16 weights for the MXU, f32 row-vector biases for the post-accumulation
    add. No per-call padding/casting passes remain in the jitted wrapper."""
    flat = []
    for (w, b) in params:
        flat.append(jnp.asarray(w, jnp.bfloat16))
        flat.append(jnp.asarray(b, jnp.float32).reshape(1, -1))
    return flat


def reference_mlp(x, params):
    """Plain-JAX reference (eval mode) applying the same bf16 operand rounding
    and f32 accumulation as the kernel.

    NOTE: bf16 operands deviate slightly from PyTorch's f32 Linear semantics;
    an exact-f32 path would need f32/HIGHEST-precision matmuls in the kernel.
    """
    h = x.astype(jnp.bfloat16).astype(jnp.float32)
    for i, (w, b) in enumerate(params):
        w32 = w.astype(jnp.bfloat16).astype(jnp.float32)
        h = h @ w32 + b.astype(jnp.float32)
        if i < len(params) - 1:
            h = jnp.maximum(h, 0.0)
            h = h.astype(jnp.bfloat16).astype(jnp.float32)
    return h.astype(x.dtype)


if __name__ == "__main__":
    key = jax.random.PRNGKey(0)
    # Small demo shapes consistent with the module.
    batch, input_size, hid1, hid2, out = 256, 32, 64, 32, 16

    kx, kp = jax.random.split(key)
    x = jax.random.normal(kx, (batch, input_size), jnp.float32)
    params = init_params(kp, input_size, hid1, hid2, out)
    flat_params = prepare_params(params)   # one-time, outside jit

    y = simple_mlp1(x, flat_params)
    y = jax.block_until_ready(y)

    y_ref = reference_mlp(x, params)
    assert y.shape == (batch, out)
    assert jnp.allclose(y, y_ref, atol=1e-2, rtol=1e-2), "mismatch vs reference"

    print("KERNEL_OK")
</pallas_src>

<mosaic_0001>
module attributes {stable_mosaic.version = 11 : i64} {
  func.func @_mlp_kernel(%arg0: i32, %arg1: memref<256x32xf32, #tpu.memory_space<vmem>>, %arg2: memref<32x64xbf16, #tpu.memory_space<vmem>>, %arg3: memref<1x64xf32, #tpu.memory_space<vmem>>, %arg4: memref<64x64xbf16, #tpu.memory_space<vmem>>, %arg5: memref<1x64xf32, #tpu.memory_space<vmem>>, %arg6: memref<64x32xbf16, #tpu.memory_space<vmem>>, %arg7: memref<1x32xf32, #tpu.memory_space<vmem>>, %arg8: memref<32x32xbf16, #tpu.memory_space<vmem>>, %arg9: memref<1x32xf32, #tpu.memory_space<vmem>>, %arg10: memref<32x16xbf16, #tpu.memory_space<vmem>>, %arg11: memref<1x16xf32, #tpu.memory_space<vmem>>, %arg12: memref<256x16xf32, #tpu.memory_space<vmem>>) attributes {dimension_semantics = [#tpu.dimension_semantics<parallel>], iteration_bounds = array<i64: 1>, scalar_prefetch = 0 : i64, scratch_operands = 0 : i64, tpu.core_type = #tpu.core_type<tc>, window_params = [{transform_indices = @transform_0, window_bounds = array<i64: 256, 32>}, {pipeline_mode = #tpu.pipeline_mode<synchronous>, transform_indices = @transform_1, window_bounds = array<i64: 32, 64>}, {pipeline_mode = #tpu.pipeline_mode<synchronous>, transform_indices = @transform_2, window_bounds = array<i64: 1, 64>}, {pipeline_mode = #tpu.pipeline_mode<synchronous>, transform_indices = @transform_3, window_bounds = array<i64: 64, 64>}, {pipeline_mode = #tpu.pipeline_mode<synchronous>, transform_indices = @transform_4, window_bounds = array<i64: 1, 64>}, {pipeline_mode = #tpu.pipeline_mode<synchronous>, transform_indices = @transform_5, window_bounds = array<i64: 64, 32>}, {pipeline_mode = #tpu.pipeline_mode<synchronous>, transform_indices = @transform_6, window_bounds = array<i64: 1, 32>}, {pipeline_mode = #tpu.pipeline_mode<synchronous>, transform_indices = @transform_7, window_bounds = array<i64: 32, 32>}, {pipeline_mode = #tpu.pipeline_mode<synchronous>, transform_indices = @transform_8, window_bounds = array<i64: 1, 32>}, {pipeline_mode = #tpu.pipeline_mode<synchronous>, transform_indices = @transform_9, window_bounds = array<i64: 32, 16>}, {pipeline_mode = #tpu.pipeline_mode<synchronous>, transform_indices = @transform_10, window_bounds = array<i64: 1, 16>}, {transform_indices = @transform_11, window_bounds = array<i64: 256, 16>}]} {
    %c0 = arith.constant 0 : index
    %c0_0 = arith.constant 0 : index
    %0 = vector.load %arg1[%c0, %c0_0] : memref<256x32xf32, #tpu.memory_space<vmem>>, vector<256x32xf32>
    %1 = arith.truncf %0 : vector<256x32xf32> to vector<256x32xbf16>
    %c0_1 = arith.constant 0 : index
    %c0_2 = arith.constant 0 : index
    %2 = vector.load %arg2[%c0_1, %c0_2] : memref<32x64xbf16, #tpu.memory_space<vmem>>, vector<32x64xbf16>
    %cst = arith.constant dense<0.000000e+00> : vector<256x64xf32>
    %3 = tpu.matmul %1, %2, %cst {dimension_numbers = #tpu.dot_dimension_numbers<[1], [0], [0], [1], [0, 0, 1, 1], [], []>} : vector<256x32xbf16>, vector<32x64xbf16>, vector<256x64xf32> -> vector<256x64xf32>
    %c0_3 = arith.constant 0 : index
    %c0_4 = arith.constant 0 : index
    %4 = vector.load %arg3[%c0_3, %c0_4] : memref<1x64xf32, #tpu.memory_space<vmem>>, vector<1x64xf32>
    %5 = vector.broadcast %4 : vector<1x64xf32> to vector<256x64xf32>
    %6 = arith.addf %3, %5 : vector<256x64xf32>
    %cst_5 = arith.constant 0.000000e+00 : f32
    %7 = vector.broadcast %cst_5 : f32 to vector<256x64xf32>
    %8 = arith.maximumf %6, %7 : vector<256x64xf32>
    %9 = arith.truncf %8 : vector<256x64xf32> to vector<256x64xbf16>
    %c0_6 = arith.constant 0 : index
    %c0_7 = arith.constant 0 : index
    %10 = vector.load %arg4[%c0_6, %c0_7] : memref<64x64xbf16, #tpu.memory_space<vmem>>, vector<64x64xbf16>
    %cst_8 = arith.constant dense<0.000000e+00> : vector<256x64xf32>
    %11 = tpu.matmul %9, %10, %cst_8 {dimension_numbers = #tpu.dot_dimension_numbers<[1], [0], [0], [1], [0, 0, 1, 1], [], []>} : vector<256x64xbf16>, vector<64x64xbf16>, vector<256x64xf32> -> vector<256x64xf32>
    %c0_9 = arith.constant 0 : index
    %c0_10 = arith.constant 0 : index
    %12 = vector.load %arg5[%c0_9, %c0_10] : memref<1x64xf32, #tpu.memory_space<vmem>>, vector<1x64xf32>
    %13 = vector.broadcast %12 : vector<1x64xf32> to vector<256x64xf32>
    %14 = arith.addf %11, %13 : vector<256x64xf32>
    %cst_11 = arith.constant 0.000000e+00 : f32
    %15 = vector.broadcast %cst_11 : f32 to vector<256x64xf32>
    %16 = arith.maximumf %14, %15 : vector<256x64xf32>
    %17 = arith.truncf %16 : vector<256x64xf32> to vector<256x64xbf16>
    %c0_12 = arith.constant 0 : index
    %c0_13 = arith.constant 0 : index
    %18 = vector.load %arg6[%c0_12, %c0_13] : memref<64x32xbf16, #tpu.memory_space<vmem>>, vector<64x32xbf16>
    %cst_14 = arith.constant dense<0.000000e+00> : vector<256x32xf32>
    %19 = tpu.matmul %17, %18, %cst_14 {dimension_numbers = #tpu.dot_dimension_numbers<[1], [0], [0], [1], [0, 0, 1, 1], [], []>} : vector<256x64xbf16>, vector<64x32xbf16>, vector<256x32xf32> -> vector<256x32xf32>
    %c0_15 = arith.constant 0 : index
    %c0_16 = arith.constant 0 : index
    %20 = vector.load %arg7[%c0_15, %c0_16] : memref<1x32xf32, #tpu.memory_space<vmem>>, vector<1x32xf32>
    %21 = vector.broadcast %20 : vector<1x32xf32> to vector<256x32xf32>
    %22 = arith.addf %19, %21 : vector<256x32xf32>
    %cst_17 = arith.constant 0.000000e+00 : f32
    %23 = vector.broadcast %cst_17 : f32 to vector<256x32xf32>
    %24 = arith.maximumf %22, %23 : vector<256x32xf32>
    %25 = arith.truncf %24 : vector<256x32xf32> to vector<256x32xbf16>
    %c0_18 = arith.constant 0 : index
    %c0_19 = arith.constant 0 : index
    %26 = vector.load %arg8[%c0_18, %c0_19] : memref<32x32xbf16, #tpu.memory_space<vmem>>, vector<32x32xbf16>
    %cst_20 = arith.constant dense<0.000000e+00> : vector<256x32xf32>
    %27 = tpu.matmul %25, %26, %cst_20 {dimension_numbers = #tpu.dot_dimension_numbers<[1], [0], [0], [1], [0, 0, 1, 1], [], []>} : vector<256x32xbf16>, vector<32x32xbf16>, vector<256x32xf32> -> vector<256x32xf32>
    %c0_21 = arith.constant 0 : index
    %c0_22 = arith.constant 0 : index
    %28 = vector.load %arg9[%c0_21, %c0_22] : memref<1x32xf32, #tpu.memory_space<vmem>>, vector<1x32xf32>
    %29 = vector.broadcast %28 : vector<1x32xf32> to vector<256x32xf32>
    %30 = arith.addf %27, %29 : vector<256x32xf32>
    %cst_23 = arith.constant 0.000000e+00 : f32
    %31 = vector.broadcast %cst_23 : f32 to vector<256x32xf32>
    %32 = arith.maximumf %30, %31 : vector<256x32xf32>
    %33 = arith.truncf %32 : vector<256x32xf32> to vector<256x32xbf16>
    %c0_24 = arith.constant 0 : index
    %c0_25 = arith.constant 0 : index
    %34 = vector.load %arg10[%c0_24, %c0_25] : memref<32x16xbf16, #tpu.memory_space<vmem>>, vector<32x16xbf16>
    %cst_26 = arith.constant dense<0.000000e+00> : vector<256x16xf32>
    %35 = tpu.matmul %33, %34, %cst_26 {dimension_numbers = #tpu.dot_dimension_numbers<[1], [0], [0], [1], [0, 0, 1, 1], [], []>} : vector<256x32xbf16>, vector<32x16xbf16>, vector<256x16xf32> -> vector<256x16xf32>
    %c0_27 = arith.constant 0 : index
    %c0_28 = arith.constant 0 : index
    %36 = vector.load %arg11[%c0_27, %c0_28] : memref<1x16xf32, #tpu.memory_space<vmem>>, vector<1x16xf32>
    %37 = vector.broadcast %36 : vector<1x16xf32> to vector<256x16xf32>
    %38 = arith.addf %35, %37 : vector<256x16xf32>
    %c0_29 = arith.constant 0 : index
    %c0_30 = arith.constant 0 : index
    %39 = vector.load %arg12[%c0_29, %c0_30] : memref<256x16xf32, #tpu.memory_space<vmem>>, vector<256x16xf32>
    tpu.vector_store %arg12[%c0_29, %c0_30], %38 {strides = array<i32>} : memref<256x16xf32, #tpu.memory_space<vmem>>, vector<256x16xf32>,
    return
  }
  func.func @transform_0(%arg0: i32) -> (i32, i32) {
    %c0_i32 = arith.constant 0 : i32
    %c0_i32_0 = arith.constant 0 : i32
    return %arg0, %c0_i32 : i32, i32
  }
  func.func @transform_1(%arg0: i32) -> (i32, i32) {
    %c0_i32 = arith.constant 0 : i32
    %c0_i32_0 = arith.constant 0 : i32
    %c0_i32_1 = arith.constant 0 : i32
    return %c0_i32, %c0_i32_0 : i32, i32
  }
  func.func @transform_2(%arg0: i32) -> (i32, i32) {
    %c0_i32 = arith.constant 0 : i32
    %c0_i32_0 = arith.constant 0 : i32
    %c0_i32_1 = arith.constant 0 : i32
    return %c0_i32, %c0_i32_0 : i32, i32
  }
  func.func @transform_3(%arg0: i32) -> (i32, i32) {
    %c0_i32 = arith.constant 0 : i32
    %c0_i32_0 = arith.constant 0 : i32
    %c0_i32_1 = arith.constant 0 : i32
    return %c0_i32, %c0_i32_0 : i32, i32
  }
  func.func @transform_4(%arg0: i32) -> (i32, i32) {
    %c0_i32 = arith.constant 0 : i32
    %c0_i32_0 = arith.constant 0 : i32
    %c0_i32_1 = arith.constant 0 : i32
    return %c0_i32, %c0_i32_0 : i32, i32
  }
  func.func @transform_5(%arg0: i32) -> (i32, i32) {
    %c0_i32 = arith.constant 0 : i32
    %c0_i32_0 = arith.constant 0 : i32
    %c0_i32_1 = arith.constant 0 : i32
    return %c0_i32, %c0_i32_0 : i32, i32
  }
  func.func @transform_6(%arg0: i32) -> (i32, i32) {
    %c0_i32 = arith.constant 0 : i32
    %c0_i32_0 = arith.constant 0 : i32
    %c0_i32_1 = arith.constant 0 : i32
    return %c0_i32, %c0_i32_0 : i32, i32
  }
  func.func @transform_7(%arg0: i32) -> (i32, i32) {
    %c0_i32 = arith.constant 0 : i32
    %c0_i32_0 = arith.constant 0 : i32
    %c0_i32_1 = arith.constant 0 : i32
    return %c0_i32, %c0_i32_0 : i32, i32
  }
  func.func @transform_8(%arg0: i32) -> (i32, i32) {
    %c0_i32 = arith.constant 0 : i32
    %c0_i32_0 = arith.constant 0 : i32
    %c0_i32_1 = arith.constant 0 : i32
    return %c0_i32, %c0_i32_0 : i32, i32
  }
  func.func @transform_9(%arg0: i32) -> (i32, i32) {
    %c0_i32 = arith.constant 0 : i32
    %c0_i32_0 = arith.constant 0 : i32
    %c0_i32_1 = arith.constant 0 : i32
    return %c0_i32, %c0_i32_0 : i32, i32
  }
  func.func @transform_10(%arg0: i32) -> (i32, i32) {
    %c0_i32 = arith.constant 0 : i32
    %c0_i32_0 = arith.constant 0 : i32
    %c0_i32_1 = arith.constant 0 : i32
    return %c0_i32, %c0_i32_0 : i32, i32
  }
  func.func @transform_11(%arg0: i32) -> (i32, i32) {
    %c0_i32 = arith.constant 0 : i32
    %c0_i32_0 = arith.constant 0 : i32
    return %arg0, %c0_i32 : i32, i32
  }
}

</mosaic_0001>

<llo_original>
// kernel: simple_mlp1.1
$region0: #{simple_mlp1.1}
  #allocation0 [shape = 'u32[]', space=smem, size = 0x4, offset = 0x4, fixed_abs, tag = 'smem constant byte address 0x4 - core index']
  #allocation1 [shape = 'u32[144,128]{1,0:T(1,128)}', space=vmem, size = 0x12000, scoped, tag = 'internal scratch']
  %s0 = inlined_call_operand.vmem [shape: f32[256,32], index: 0, kind: input, shape index: {}]
  %s1 = inlined_call_operand.vmem [shape: bf16[32,64], index: 1, kind: input, shape index: {}]
  %s2 = inlined_call_operand.vmem [shape: f32[1,64], index: 2, kind: input, shape index: {}]
  %s3 = inlined_call_operand.vmem [shape: bf16[64,64], index: 3, kind: input, shape index: {}]
  %s4 = inlined_call_operand.vmem [shape: f32[1,64], index: 4, kind: input, shape index: {}]
  %s5 = inlined_call_operand.vmem [shape: bf16[64,32], index: 5, kind: input, shape index: {}]
  %s6 = inlined_call_operand.vmem [shape: f32[1,32], index: 6, kind: input, shape index: {}]
  %s7 = inlined_call_operand.vmem [shape: bf16[32,32], index: 7, kind: input, shape index: {}]
  %s8 = inlined_call_operand.vmem [shape: f32[1,32], index: 8, kind: input, shape index: {}]
  %s9 = inlined_call_operand.vmem [shape: bf16[32,16], index: 9, kind: input, shape index: {}]
  %s10 = inlined_call_operand.vmem [shape: f32[1,16], index: 10, kind: input, shape index: {}]
  %s11 = inlined_call_operand.vmem [shape: f32[256,16], index: 11, kind: output, shape index: {}]
  %s12 = sld [smem:[#allocation0]]
  $region54: #{simple_mlp1.1} parent=0
    _
  %s14 = ssub.s32 1, %s12
  %s15 = scalar_select 0, %s14, %s12
  // Predicated region
  $region2: #{simple_mlp1.1} parent=0 // pred_check
    _
  $region3: #{simple_mlp1.1} parent=0 // pred_check_branch
    %17 = sbr.rel (0) target = $region5
  $region4: #{simple_mlp1.1} parent=0 // pred_region
    _
  $region5: #{simple_mlp1.1} parent=0 // pred_fallthru
    _
  // Predicated region
  $region6: #{simple_mlp1.1} parent=0 // pred_check
    _
  $region7: #{simple_mlp1.1} parent=0 // pred_check_branch
    %19 = sbr.rel (0) target = $region9
  $region8: #{simple_mlp1.1} parent=0 // pred_region
    _
  $region9: #{simple_mlp1.1} parent=0 // pred_fallthru
    _
  // Predicated region
  $region10: #{simple_mlp1.1} parent=0 // pred_check
    _
  $region11: #{simple_mlp1.1} parent=0 // pred_check_branch
    %21 = sbr.rel (0) target = $region13
  $region12: #{simple_mlp1.1} parent=0 // pred_region
    _
  $region13: #{simple_mlp1.1} parent=0 // pred_fallthru
    _
  // Predicated region
  $region14: #{simple_mlp1.1} parent=0 // pred_check
    _
  $region15: #{simple_mlp1.1} parent=0 // pred_check_branch
    %23 = sbr.rel (0) target = $region17
  $region16: #{simple_mlp1.1} parent=0 // pred_region
    _
  $region17: #{simple_mlp1.1} parent=0 // pred_fallthru
    _
  // Predicated region
  $region18: #{simple_mlp1.1} parent=0 // pred_check
    _
  $region19: #{simple_mlp1.1} parent=0 // pred_check_branch
    %25 = sbr.rel (0) target = $region21
  $region20: #{simple_mlp1.1} parent=0 // pred_region
    _
  $region21: #{simple_mlp1.1} parent=0 // pred_fallthru
    _
  // Predicated region
  $region22: #{simple_mlp1.1} parent=0 // pred_check
    _
  $region23: #{simple_mlp1.1} parent=0 // pred_check_branch
    %27 = sbr.rel (0) target = $region25
  $region24: #{simple_mlp1.1} parent=0 // pred_region
    _
  $region25: #{simple_mlp1.1} parent=0 // pred_fallthru
    _
  // Predicated region
  $region26: #{simple_mlp1.1} parent=0 // pred_check
    _
  $region27: #{simple_mlp1.1} parent=0 // pred_check_branch
    %29 = sbr.rel (0) target = $region29
  $region28: #{simple_mlp1.1} parent=0 // pred_region
    _
  $region29: #{simple_mlp1.1} parent=0 // pred_fallthru
    _
  // Predicated region
  $region30: #{simple_mlp1.1} parent=0 // pred_check
    _
  $region31: #{simple_mlp1.1} parent=0 // pred_check_branch
    %31 = sbr.rel (0) target = $region33
  $region32: #{simple_mlp1.1} parent=0 // pred_region
    _
  $region33: #{simple_mlp1.1} parent=0 // pred_fallthru
    _
  // Predicated region
  $region34: #{simple_mlp1.1} parent=0 // pred_check
    _
  $region35: #{simple_mlp1.1} parent=0 // pred_check_branch
    %33 = sbr.rel (0) target = $region37
  $region36: #{simple_mlp1.1} parent=0 // pred_region
    _
  $region37: #{simple_mlp1.1} parent=0 // pred_fallthru
    _
  // Predicated region
  $region38: #{simple_mlp1.1} parent=0 // pred_check
    _
  $region39: #{simple_mlp1.1} parent=0 // pred_check_branch
    %35 = sbr.rel (0) target = $region41
  $region40: #{simple_mlp1.1} parent=0 // pred_region
    _
  $region41: #{simple_mlp1.1} parent=0 // pred_fallthru
    _
  // Predicated region
  $region42: #{simple_mlp1.1} parent=0 // pred_check
    _
  $region43: #{simple_mlp1.1} parent=0 // pred_check_branch
    %37 = sbr.rel (0) target = $region45
  $region44: #{simple_mlp1.1} parent=0 // pred_region
    _
  $region45: #{simple_mlp1.1} parent=0 // pred_fallthru
    _
  %v39 = vld [vmem:[%s0] sm:$0xff]
  %v40 = vld [vmem:[%s0 + $0x8] sm:$0xff]
  %v41 = vld [vmem:[%s0 + $0x10] sm:$0xff]
  %v42 = vld [vmem:[%s0 + $0x18] sm:$0xff]
  %v43 = vld [vmem:[%s0 + $0x20] sm:$0xff]
  %v44 = vld [vmem:[%s0 + $0x28] sm:$0xff]
  %v45 = vld [vmem:[%s0 + $0x30] sm:$0xff]
  %v46 = vld [vmem:[%s0 + $0x38] sm:$0xff]
  %v47 = vld [vmem:[%s0 + $0x40] sm:$0xff]
  %v48 = vld [vmem:[%s0 + $0x48] sm:$0xff]
  %v49 = vld [vmem:[%s0 + $0x50] sm:$0xff]
  %v50 = vld [vmem:[%s0 + $0x58] sm:$0xff]
  %v51 = vld [vmem:[%s0 + $0x60] sm:$0xff]
  %v52 = vld [vmem:[%s0 + $0x68] sm:$0xff]
  %v53 = vld [vmem:[%s0 + $0x70] sm:$0xff]
  %v54 = vld [vmem:[%s0 + $0x78] sm:$0xff]
  %v55 = vld [vmem:[%s0 + $0x80] sm:$0xff]
  %v56 = vld [vmem:[%s0 + $0x88] sm:$0xff]
  %v57 = vld [vmem:[%s0 + $0x90] sm:$0xff]
  %v58 = vld [vmem:[%s0 + $0x98] sm:$0xff]
  %v59 = vld [vmem:[%s0 + $0xa0] sm:$0xff]
  %v60 = vld [vmem:[%s0 + $0xa8] sm:$0xff]
  %v61 = vld [vmem:[%s0 + $0xb0] sm:$0xff]
  %v62 = vld [vmem:[%s0 + $0xb8] sm:$0xff]
  %v63 = vld [vmem:[%s0 + $0xc0] sm:$0xff]
  %v64 = vld [vmem:[%s0 + $0xc8] sm:$0xff]
  %v65 = vld [vmem:[%s0 + $0xd0] sm:$0xff]
  %v66 = vld [vmem:[%s0 + $0xd8] sm:$0xff]
  %v67 = vld [vmem:[%s0 + $0xe0] sm:$0xff]
  %v68 = vld [vmem:[%s0 + $0xe8] sm:$0xff]
  %v69 = vld [vmem:[%s0 + $0xf0] sm:$0xff]
  %v70 = vld [vmem:[%s0 + $0xf8] sm:$0xff]
  %v71 = vpack.c.bf16 %v40, %v39
  %v72 = vpack.c.bf16 %v42, %v41
  %v73 = vpack.c.bf16 %v44, %v43
  %v74 = vpack.c.bf16 %v46, %v45
  %v75 = vpack.c.bf16 %v48, %v47
  %v76 = vpack.c.bf16 %v50, %v49
  %v77 = vpack.c.bf16 %v52, %v51
  %v78 = vpack.c.bf16 %v54, %v53
  %v79 = vpack.c.bf16 %v56, %v55
  %v80 = vpack.c.bf16 %v58, %v57
  %v81 = vpack.c.bf16 %v60, %v59
  %v82 = vpack.c.bf16 %v62, %v61
  %v83 = vpack.c.bf16 %v64, %v63
  %v84 = vpack.c.bf16 %v66, %v65
  %v85 = vpack.c.bf16 %v68, %v67
  %v86 = vpack.c.bf16 %v70, %v69
  %v87 = vld [vmem:[%s1] sm:$0xf]
  %v88 = vld [vmem:[%s1 + $0x4] sm:$0xf]
  %v89 = vld [vmem:[%s1 + $0x8] sm:$0xf]
  %v90 = vld [vmem:[%s1 + $0xc] sm:$0xf]
  %v91 = vld [vmem:[%s2] sm:$0x1]
  %v93 = vlaneseq
  %v94 = vshrl.u32 %v93, 7
  %v95 = vsub.s32 0, %v94
  %v96 = vrot.slane %v91, %v95
  %v102 = vunpack.c.l.b16 %v87
  %v103 = vunpack.c.l.b16 %v88
  %v104 = vunpack.c.l.b16 %v89
  %v105 = vunpack.c.l.b16 %v90
  %v106 = vpack.c.b16 %v103, %v102
  %v107 = vpack.c.b16 %v105, %v104
  %vm110 = vcmask 261120
  %v112 = vsel %vm110, %v71, 0
  %v115 = vsel %vm110, %v72, 0
  %v118 = vsel %vm110, %v73, 0
  %v121 = vsel %vm110, %v74, 0
  %v124 = vsel %vm110, %v75, 0
  %v127 = vsel %vm110, %v76, 0
  %v130 = vsel %vm110, %v77, 0
  %v133 = vsel %vm110, %v78, 0
  %v136 = vsel %vm110, %v79, 0
  %v139 = vsel %vm110, %v80, 0
  %v142 = vsel %vm110, %v81, 0
  %v145 = vsel %vm110, %v82, 0
  %v148 = vsel %vm110, %v83, 0
  %v151 = vsel %vm110, %v84, 0
  %v154 = vsel %vm110, %v85, 0
  %v157 = vsel %vm110, %v86, 0
  %159 = vmatprep.subr.bf16.mxu0 0
  %160 = vmatpush1.bf16.msra.mxu0 0
  %161 = vmatprep.subr.bf16.mxu0 0
  %162 = vmatpush1.bf16.msra.mxu0 0
  %163 = vmatprep.subr.bf16.mxu0 0
  %164 = vmatpush1.bf16.msra.mxu0 0
  %165 = vmatprep.subr.bf16.mxu0 0
  %166 = vmatpush1.bf16.msra.mxu0 0
  %167 = vmatprep.subr.bf16.mxu0 0
  %168 = vmatpush1.bf16.msra.mxu0 0
  %169 = vmatprep.subr.bf16.mxu0 0
  %170 = vmatpush1.bf16.msra.mxu0 0
  %171 = vmatprep.subr.bf16.mxu0 0
  %172 = vmatpush1.bf16.msra.mxu0 %v107
  %173 = vmatprep.subr.bf16.mxu0 0
  %174 = vmatpush1.bf16.msra.mxu0 %v106
  %175 = vmatprep.subr.bf16.mxu0 0
  %176 = vmatpush2.bf16.msra.mxu0 0
  %177 = vmatprep.subr.bf16.mxu0 0
  %178 = vmatpush2.bf16.msra.mxu0 0
  %179 = vmatprep.subr.bf16.mxu0 0
  %180 = vmatpush2.bf16.msra.mxu0 0
  %181 = vmatprep.subr.bf16.mxu0 0
  %182 = vmatpush2.bf16.msra.mxu0 0
  %183 = vmatprep.subr.bf16.mxu0 0
  %184 = vmatpush2.bf16.msra.mxu0 0
  %185 = vmatprep.subr.bf16.mxu0 0
  %186 = vmatpush2.bf16.msra.mxu0 0
  %187 = vmatprep.subr.bf16.mxu0 0
  %188 = vmatpush2.bf16.msra.mxu0 0
  %189 = vmatprep.subr.bf16.mxu0 0
  %190 = vmatpush2.bf16.msra.mxu0 0
  %191 = vmatprep.mubr.bf16.mxu0 0
  %192 = vmatmul.mubr.bf16.gmra.mxu0 %v112
  %v193 = vpop.f32.mrf.mxu0
  %v194 = vadd.f32 %v96, %v193
  %v195 = vpop.f32.mrf.mxu0
  %v196 = vpop.f32.mrf.mxu0
  %v197 = vadd.f32 %v96, %v196
  %v198 = vpop.f32.mrf.mxu0
  %199 = vmatprep.mubr.bf16.mxu0 0
  %200 = vmatmul.mubr.bf16.gmra.mxu0 %v115
  %v201 = vpop.f32.mrf.mxu0
  %v202 = vadd.f32 %v96, %v201
  %v203 = vpop.f32.mrf.mxu0
  %v204 = vpop.f32.mrf.mxu0
  %v205 = vadd.f32 %v96, %v204
  %v206 = vpop.f32.mrf.mxu0
  %207 = vmatprep.mubr.bf16.mxu0 0
  %208 = vmatmul.mubr.bf16.gmra.mxu0 %v118
  %v209 = vpop.f32.mrf.mxu0
  %v210 = vadd.f32 %v96, %v209
  %v211 = vpop.f32.mrf.mxu0
  %v212 = vpop.f32.mrf.mxu0
  %v213 = vadd.f32 %v96, %v212
  %v214 = vpop.f32.mrf.mxu0
  %215 = vmatprep.mubr.bf16.mxu0 0
  %216 = vmatmul.mubr.bf16.gmra.mxu0 %v121
  %v217 = vpop.f32.mrf.mxu0
  %v218 = vadd.f32 %v96, %v217
  %v219 = vpop.f32.mrf.mxu0
  %v220 = vpop.f32.mrf.mxu0
  %v221 = vadd.f32 %v96, %v220
  %v222 = vpop.f32.mrf.mxu0
  %223 = vmatprep.mubr.bf16.mxu0 0
  %224 = vmatmul.mubr.bf16.gmra.mxu0 %v124
  %v225 = vpop.f32.mrf.mxu0
  %v226 = vadd.f32 %v96, %v225
  %v227 = vpop.f32.mrf.mxu0
  %v228 = vpop.f32.mrf.mxu0
  %v229 = vadd.f32 %v96, %v228
  %v230 = vpop.f32.mrf.mxu0
  %231 = vmatprep.mubr.bf16.mxu0 0
  %232 = vmatmul.mubr.bf16.gmra.mxu0 %v127
  %v233 = vpop.f32.mrf.mxu0
  %v234 = vadd.f32 %v96, %v233
  %v235 = vpop.f32.mrf.mxu0
  %v236 = vpop.f32.mrf.mxu0
  %v237 = vadd.f32 %v96, %v236
  %v238 = vpop.f32.mrf.mxu0
  %239 = vmatprep.mubr.bf16.mxu0 0
  %240 = vmatmul.mubr.bf16.gmra.mxu0 %v130
  %v241 = vpop.f32.mrf.mxu0
  %v242 = vadd.f32 %v96, %v241
  %v243 = vpop.f32.mrf.mxu0
  %v244 = vpop.f32.mrf.mxu0
  %v245 = vadd.f32 %v96, %v244
  %v246 = vpop.f32.mrf.mxu0
  %247 = vmatprep.mubr.bf16.mxu0 0
  %248 = vmatmul.mubr.bf16.gmra.mxu0 %v133
  %v249 = vpop.f32.mrf.mxu0
  %v250 = vadd.f32 %v96, %v249
  %v251 = vpop.f32.mrf.mxu0
  %v252 = vpop.f32.mrf.mxu0
  %v253 = vadd.f32 %v96, %v252
  %v254 = vpop.f32.mrf.mxu0
  %255 = vmatprep.mubr.bf16.mxu0 0
  %256 = vmatmul.mubr.bf16.gmra.mxu0 %v136
  %v257 = vpop.f32.mrf.mxu0
  %v258 = vadd.f32 %v96, %v257
  %v259 = vpop.f32.mrf.mxu0
  %v260 = vpop.f32.mrf.mxu0
  %v261 = vadd.f32 %v96, %v260
  %v262 = vpop.f32.mrf.mxu0
  %263 = vmatprep.mubr.bf16.mxu0 0
  %264 = vmatmul.mubr.bf16.gmra.mxu0 %v139
  %v265 = vpop.f32.mrf.mxu0
  %v266 = vadd.f32 %v96, %v265
  %v267 = vpop.f32.mrf.mxu0
  %v268 = vpop.f32.mrf.mxu0
  %v269 = vadd.f32 %v96, %v268
  %v270 = vpop.f32.mrf.mxu0
  %271 = vmatprep.mubr.bf16.mxu0 0
  %272 = vmatmul.mubr.bf16.gmra.mxu0 %v142
  %v273 = vpop.f32.mrf.mxu0
  %v274 = vadd.f32 %v96, %v273
  %v275 = vpop.f32.mrf.mxu0
  %v276 = vpop.f32.mrf.mxu0
  %v277 = vadd.f32 %v96, %v276
  %v278 = vpop.f32.mrf.mxu0
  %279 = vmatprep.mubr.bf16.mxu0 0
  %280 = vmatmul.mubr.bf16.gmra.mxu0 %v145
  %v281 = vpop.f32.mrf.mxu0
  %v282 = vadd.f32 %v96, %v281
  %v283 = vpop.f32.mrf.mxu0
  %v284 = vpop.f32.mrf.mxu0
  %v285 = vadd.f32 %v96, %v284
  %v286 = vpop.f32.mrf.mxu0
  %287 = vmatprep.mubr.bf16.mxu0 0
  %288 = vmatmul.mubr.bf16.gmra.mxu0 %v148
  %v289 = vpop.f32.mrf.mxu0
  %v290 = vadd.f32 %v96, %v289
  %v291 = vpop.f32.mrf.mxu0
  %v292 = vpop.f32.mrf.mxu0
  %v293 = vadd.f32 %v96, %v292
  %v294 = vpop.f32.mrf.mxu0
  %295 = vmatprep.mubr.bf16.mxu0 0
  %296 = vmatmul.mubr.bf16.gmra.mxu0 %v151
  %v297 = vpop.f32.mrf.mxu0
  %v298 = vadd.f32 %v96, %v297
  %v299 = vpop.f32.mrf.mxu0
  %v300 = vpop.f32.mrf.mxu0
  %v301 = vadd.f32 %v96, %v300
  %v302 = vpop.f32.mrf.mxu0
  %303 = vmatprep.mubr.bf16.mxu0 0
  %304 = vmatmul.mubr.bf16.gmra.mxu0 %v154
  %v305 = vpop.f32.mrf.mxu0
  %v306 = vadd.f32 %v96, %v305
  %v307 = vpop.f32.mrf.mxu0
  %v308 = vpop.f32.mrf.mxu0
  %v309 = vadd.f32 %v96, %v308
  %v310 = vpop.f32.mrf.mxu0
  %311 = vmatprep.mubr.bf16.mxu0 0
  %312 = vmatmul.mubr.bf16.gmra.mxu0 %v157
  %v313 = vpop.f32.mrf.mxu0
  %v314 = vadd.f32 %v96, %v313
  %v315 = vpop.f32.mrf.mxu0
  %v316 = vpop.f32.mrf.mxu0
  %v317 = vadd.f32 %v96, %v316
  %v318 = vpop.f32.mrf.mxu0
  %319 = vdwg.mxu0
  %v320 = vmax.f32 %v194, 0.0
  %v321 = vmax.f32 %v197, 0.0
  %v322 = vmax.f32 %v202, 0.0
  %v323 = vmax.f32 %v205, 0.0
  %v324 = vmax.f32 %v210, 0.0
  %v325 = vmax.f32 %v213, 0.0
  %v326 = vmax.f32 %v218, 0.0
  %v327 = vmax.f32 %v221, 0.0
  %v328 = vmax.f32 %v226, 0.0
  %v329 = vmax.f32 %v229, 0.0
  %v330 = vmax.f32 %v234, 0.0
  %v331 = vmax.f32 %v237, 0.0
  %v332 = vmax.f32 %v242, 0.0
  %v333 = vmax.f32 %v245, 0.0
  %v334 = vmax.f32 %v250, 0.0
  %v335 = vmax.f32 %v253, 0.0
  %v336 = vmax.f32 %v258, 0.0
  %v337 = vmax.f32 %v261, 0.0
  %v338 = vmax.f32 %v266, 0.0
  %v339 = vmax.f32 %v269, 0.0
  %v340 = vmax.f32 %v274, 0.0
  %v341 = vmax.f32 %v277, 0.0
  %v342 = vmax.f32 %v282, 0.0
  %v343 = vmax.f32 %v285, 0.0
  %v344 = vmax.f32 %v290, 0.0
  %v345 = vmax.f32 %v293, 0.0
  %v346 = vmax.f32 %v298, 0.0
  %v347 = vmax.f32 %v301, 0.0
  %v348 = vmax.f32 %v306, 0.0
  %v349 = vmax.f32 %v309, 0.0
  %v350 = vmax.f32 %v314, 0.0
  %v351 = vmax.f32 %v317, 0.0
  %v352 = vpack.c.bf16 %v321, %v320
  %v353 = vpack.c.bf16 %v323, %v322
  %v354 = vpack.c.bf16 %v325, %v324
  %v355 = vpack.c.bf16 %v327, %v326
  %v356 = vpack.c.bf16 %v329, %v328
  %v357 = vpack.c.bf16 %v331, %v330
  %v358 = vpack.c.bf16 %v333, %v332
  %v359 = vpack.c.bf16 %v335, %v334
  %v360 = vpack.c.bf16 %v337, %v336
  %v361 = vpack.c.bf16 %v339, %v338
  %v362 = vpack.c.bf16 %v341, %v340
  %v363 = vpack.c.bf16 %v343, %v342
  %v364 = vpack.c.bf16 %v345, %v344
  %v365 = vpack.c.bf16 %v347, %v346
  %v366 = vpack.c.bf16 %v349, %v348
  %v367 = vpack.c.bf16 %v351, %v350
  %v368 = vld [vmem:[%s3] sm:$0xf]
  %v369 = vld [vmem:[%s3 + $0x4] sm:$0xf]
  %v370 = vld [vmem:[%s3 + $0x8] sm:$0xf]
  %v371 = vld [vmem:[%s3 + $0xc] sm:$0xf]
  %v372 = vld [vmem:[%s3 + $0x10] sm:$0xf]
  %v373 = vld [vmem:[%s3 + $0x14] sm:$0xf]
  %v374 = vld [vmem:[%s3 + $0x18] sm:$0xf]
  %v375 = vld [vmem:[%s3 + $0x1c] sm:$0xf]
  %v376 = vld [vmem:[%s4] sm:$0x1]
  %v378 = vlaneseq
  %v379 = vshrl.u32 %v378, 7
  %v380 = vsub.s32 0, %v379
  %v381 = vrot.slane %v376, %v380
  %v391 = vunpack.c.l.b16 %v368
  %v392 = vunpack.c.l.b16 %v369
  %v393 = vunpack.c.l.b16 %v370
  %v394 = vunpack.c.l.b16 %v371
  %v395 = vunpack.c.l.b16 %v372
  %v396 = vunpack.c.l.b16 %v373
  %v397 = vunpack.c.l.b16 %v374
  %v398 = vunpack.c.l.b16 %v375
  %v399 = vpack.c.b16 %v392, %v391
  %v400 = vpack.c.b16 %v394, %v393
  %v401 = vpack.c.b16 %v396, %v395
  %v402 = vpack.c.b16 %v398, %v397
  %vm407 = vcmask 523264
  %v409 = vsel %vm407, %v352, 0
  %v412 = vsel %vm407, %v353, 0
  %v415 = vsel %vm407, %v354, 0
  %v418 = vsel %vm407, %v355, 0
  %v421 = vsel %vm407, %v356, 0
  %v424 = vsel %vm407, %v357, 0
  %v427 = vsel %vm407, %v358, 0
  %v430 = vsel %vm407, %v359, 0
  %v433 = vsel %vm407, %v360, 0
  %v436 = vsel %vm407, %v361, 0
  %v439 = vsel %vm407, %v362, 0
  %v442 = vsel %vm407, %v363, 0
  %v445 = vsel %vm407, %v364, 0
  %v448 = vsel %vm407, %v365, 0
  %v451 = vsel %vm407, %v366, 0
  %v454 = vsel %vm407, %v367, 0
  %456 = vmatprep.subr.bf16.mxu0 0
  %457 = vmatpush1.bf16.msra.mxu0 0
  %458 = vmatprep.subr.bf16.mxu0 0
  %459 = vmatpush1.bf16.msra.mxu0 0
  %460 = vmatprep.subr.bf16.mxu0 0
  %461 = vmatpush1.bf16.msra.mxu0 0
  %462 = vmatprep.subr.bf16.mxu0 0
  %463 = vmatpush1.bf16.msra.mxu0 0
  %464 = vmatprep.subr.bf16.mxu0 0
  %465 = vmatpush1.bf16.msra.mxu0 %v402
  %466 = vmatprep.subr.bf16.mxu0 0
  %467 = vmatpush1.bf16.msra.mxu0 %v401
  %468 = vmatprep.subr.bf16.mxu0 0
  %469 = vmatpush1.bf16.msra.mxu0 %v400
  %470 = vmatprep.subr.bf16.mxu0 0
  %471 = vmatpush1.bf16.msra.mxu0 %v399
  %472 = vmatprep.subr.bf16.mxu0 0
  %473 = vmatpush2.bf16.msra.mxu0 0
  %474 = vmatprep.subr.bf16.mxu0 0
  %475 = vmatpush2.bf16.msra.mxu0 0
  %476 = vmatprep.subr.bf16.mxu0 0
  %477 = vmatpush2.bf16.msra.mxu0 0
  %478 = vmatprep.subr.bf16.mxu0 0
  %479 = vmatpush2.bf16.msra.mxu0 0
  %480 = vmatprep.subr.bf16.mxu0 0
  %481 = vmatpush2.bf16.msra.mxu0 0
  %482 = vmatprep.subr.bf16.mxu0 0
  %483 = vmatpush2.bf16.msra.mxu0 0
  %484 = vmatprep.subr.bf16.mxu0 0
  %485 = vmatpush2.bf16.msra.mxu0 0
  %486 = vmatprep.subr.bf16.mxu0 0
  %487 = vmatpush2.bf16.msra.mxu0 0
  %488 = vmatprep.mubr.bf16.mxu0 0
  %489 = vmatmul.mubr.bf16.gmra.mxu0 %v409
  %v490 = vpop.f32.mrf.mxu0
  %v491 = vadd.f32 %v381, %v490
  %v492 = vpop.f32.mrf.mxu0
  %v493 = vpop.f32.mrf.mxu0
  %v494 = vadd.f32 %v381, %v493
  %v495 = vpop.f32.mrf.mxu0
  %496 = vmatprep.mubr.bf16.mxu0 0
  %497 = vmatmul.mubr.bf16.gmra.mxu0 %v412
  %v498 = vpop.f32.mrf.mxu0
  %v499 = vadd.f32 %v381, %v498
  %v500 = vpop.f32.mrf.mxu0
  %v501 = vpop.f32.mrf.mxu0
  %v502 = vadd.f32 %v381, %v501
  %v503 = vpop.f32.mrf.mxu0
  %504 = vmatprep.mubr.bf16.mxu0 0
  %505 = vmatmul.mubr.bf16.gmra.mxu0 %v415
  %v506 = vpop.f32.mrf.mxu0
  %v507 = vadd.f32 %v381, %v506
  %v508 = vpop.f32.mrf.mxu0
  %v509 = vpop.f32.mrf.mxu0
  %v510 = vadd.f32 %v381, %v509
  %v511 = vpop.f32.mrf.mxu0
  %512 = vmatprep.mubr.bf16.mxu0 0
  %513 = vmatmul.mubr.bf16.gmra.mxu0 %v418
  %v514 = vpop.f32.mrf.mxu0
  %v515 = vadd.f32 %v381, %v514
  %v516 = vpop.f32.mrf.mxu0
  %v517 = vpop.f32.mrf.mxu0
  %v518 = vadd.f32 %v381, %v517
  %v519 = vpop.f32.mrf.mxu0
  %520 = vmatprep.mubr.bf16.mxu0 0
  %521 = vmatmul.mubr.bf16.gmra.mxu0 %v421
  %v522 = vpop.f32.mrf.mxu0
  %v523 = vadd.f32 %v381, %v522
  %v524 = vpop.f32.mrf.mxu0
  %v525 = vpop.f32.mrf.mxu0
  %v526 = vadd.f32 %v381, %v525
  %v527 = vpop.f32.mrf.mxu0
  %528 = vmatprep.mubr.bf16.mxu0 0
  %529 = vmatmul.mubr.bf16.gmra.mxu0 %v424
  %v530 = vpop.f32.mrf.mxu0
  %v531 = vadd.f32 %v381, %v530
  %v532 = vpop.f32.mrf.mxu0
  %v533 = vpop.f32.mrf.mxu0
  %v534 = vadd.f32 %v381, %v533
  %v535 = vpop.f32.mrf.mxu0
  %536 = vmatprep.mubr.bf16.mxu0 0
  %537 = vmatmul.mubr.bf16.gmra.mxu0 %v427
  %v538 = vpop.f32.mrf.mxu0
  %v539 = vadd.f32 %v381, %v538
  %v540 = vpop.f32.mrf.mxu0
  %v541 = vpop.f32.mrf.mxu0
  %v542 = vadd.f32 %v381, %v541
  %v543 = vpop.f32.mrf.mxu0
  %544 = vmatprep.mubr.bf16.mxu0 0
  %545 = vmatmul.mubr.bf16.gmra.mxu0 %v430
  %v546 = vpop.f32.mrf.mxu0
  %v547 = vadd.f32 %v381, %v546
  %v548 = vpop.f32.mrf.mxu0
  %v549 = vpop.f32.mrf.mxu0
  %v550 = vadd.f32 %v381, %v549
  %v551 = vpop.f32.mrf.mxu0
  %552 = vmatprep.mubr.bf16.mxu0 0
  %553 = vmatmul.mubr.bf16.gmra.mxu0 %v433
  %v554 = vpop.f32.mrf.mxu0
  %v555 = vadd.f32 %v381, %v554
  %v556 = vpop.f32.mrf.mxu0
  %v557 = vpop.f32.mrf.mxu0
  %v558 = vadd.f32 %v381, %v557
  %v559 = vpop.f32.mrf.mxu0
  %560 = vmatprep.mubr.bf16.mxu0 0
  %561 = vmatmul.mubr.bf16.gmra.mxu0 %v436
  %v562 = vpop.f32.mrf.mxu0
  %v563 = vadd.f32 %v381, %v562
  %v564 = vpop.f32.mrf.mxu0
  %v565 = vpop.f32.mrf.mxu0
  %v566 = vadd.f32 %v381, %v565
  %v567 = vpop.f32.mrf.mxu0
  %568 = vmatprep.mubr.bf16.mxu0 0
  %569 = vmatmul.mubr.bf16.gmra.mxu0 %v439
  %v570 = vpop.f32.mrf.mxu0
  %v571 = vadd.f32 %v381, %v570
  %v572 = vpop.f32.mrf.mxu0
  %v573 = vpop.f32.mrf.mxu0
  %v574 = vadd.f32 %v381, %v573
  %v575 = vpop.f32.mrf.mxu0
  %576 = vmatprep.mubr.bf16.mxu0 0
  %577 = vmatmul.mubr.bf16.gmra.mxu0 %v442
  %v578 = vpop.f32.mrf.mxu0
  %v579 = vadd.f32 %v381, %v578
  %v580 = vpop.f32.mrf.mxu0
  %v581 = vpop.f32.mrf.mxu0
  %v582 = vadd.f32 %v381, %v581
  %v583 = vpop.f32.mrf.mxu0
  %584 = vmatprep.mubr.bf16.mxu0 0
  %585 = vmatmul.mubr.bf16.gmra.mxu0 %v445
  %v586 = vpop.f32.mrf.mxu0
  %v587 = vadd.f32 %v381, %v586
  %v588 = vpop.f32.mrf.mxu0
  %v589 = vpop.f32.mrf.mxu0
  %v590 = vadd.f32 %v381, %v589
  %v591 = vpop.f32.mrf.mxu0
  %592 = vmatprep.mubr.bf16.mxu0 0
  %593 = vmatmul.mubr.bf16.gmra.mxu0 %v448
  %v594 = vpop.f32.mrf.mxu0
  %v595 = vadd.f32 %v381, %v594
  %v596 = vpop.f32.mrf.mxu0
  %v597 = vpop.f32.mrf.mxu0
  %v598 = vadd.f32 %v381, %v597
  %v599 = vpop.f32.mrf.mxu0
  %600 = vmatprep.mubr.bf16.mxu0 0
  %601 = vmatmul.mubr.bf16.gmra.mxu0 %v451
  %v602 = vpop.f32.mrf.mxu0
  %v603 = vadd.f32 %v381, %v602
  %v604 = vpop.f32.mrf.mxu0
  %v605 = vpop.f32.mrf.mxu0
  %v606 = vadd.f32 %v381, %v605
  %v607 = vpop.f32.mrf.mxu0
  %608 = vmatprep.mubr.bf16.mxu0 0
  %609 = vmatmul.mubr.bf16.gmra.mxu0 %v454
  %v610 = vpop.f32.mrf.mxu0
  %v611 = vadd.f32 %v381, %v610
  %v612 = vpop.f32.mrf.mxu0
  %v613 = vpop.f32.mrf.mxu0
  %v614 = vadd.f32 %v381, %v613
  %v615 = vpop.f32.mrf.mxu0
  %616 = vdwg.mxu0
  %v617 = vmax.f32 %v491, 0.0
  %v618 = vmax.f32 %v494, 0.0
  %v619 = vmax.f32 %v499, 0.0
  %v620 = vmax.f32 %v502, 0.0
  %v621 = vmax.f32 %v507, 0.0
  %v622 = vmax.f32 %v510, 0.0
  %v623 = vmax.f32 %v515, 0.0
  %v624 = vmax.f32 %v518, 0.0
  %v625 = vmax.f32 %v523, 0.0
  %v626 = vmax.f32 %v526, 0.0
  %v627 = vmax.f32 %v531, 0.0
  %v628 = vmax.f32 %v534, 0.0
  %v629 = vmax.f32 %v539, 0.0
  %v630 = vmax.f32 %v542, 0.0
  %v631 = vmax.f32 %v547, 0.0
  %v632 = vmax.f32 %v550, 0.0
  %v633 = vmax.f32 %v555, 0.0
  %v634 = vmax.f32 %v558, 0.0
  %v635 = vmax.f32 %v563, 0.0
  %v636 = vmax.f32 %v566, 0.0
  %v637 = vmax.f32 %v571, 0.0
  %v638 = vmax.f32 %v574, 0.0
  %v639 = vmax.f32 %v579, 0.0
  %v640 = vmax.f32 %v582, 0.0
  %v641 = vmax.f32 %v587, 0.0
  %v642 = vmax.f32 %v590, 0.0
  %v643 = vmax.f32 %v595, 0.0
  %v644 = vmax.f32 %v598, 0.0
  %v645 = vmax.f32 %v603, 0.0
  %v646 = vmax.f32 %v606, 0.0
  %v647 = vmax.f32 %v611, 0.0
  %v648 = vmax.f32 %v614, 0.0
  %v649 = vpack.c.bf16 %v618, %v617
  %v650 = vpack.c.bf16 %v620, %v619
  %v651 = vpack.c.bf16 %v622, %v621
  %v652 = vpack.c.bf16 %v624, %v623
  %v653 = vpack.c.bf16 %v626, %v625
  %v654 = vpack.c.bf16 %v628, %v627
  %v655 = vpack.c.bf16 %v630, %v629
  %v656 = vpack.c.bf16 %v632, %v631
  %v657 = vpack.c.bf16 %v634, %v633
  %v658 = vpack.c.bf16 %v636, %v635
  %v659 = vpack.c.bf16 %v638, %v637
  %v660 = vpack.c.bf16 %v640, %v639
  %v661 = vpack.c.bf16 %v642, %v641
  %v662 = vpack.c.bf16 %v644, %v643
  %v663 = vpack.c.bf16 %v646, %v645
  %v664 = vpack.c.bf16 %v648, %v647
  %v665 = vld [vmem:[%s5] sm:$0xf]
  %v666 = vld [vmem:[%s5 + $0x4] sm:$0xf]
  %v667 = vld [vmem:[%s5 + $0x8] sm:$0xf]
  %v668 = vld [vmem:[%s5 + $0xc] sm:$0xf]
  %v669 = vld [vmem:[%s5 + $0x10] sm:$0xf]
  %v670 = vld [vmem:[%s5 + $0x14] sm:$0xf]
  %v671 = vld [vmem:[%s5 + $0x18] sm:$0xf]
  %v672 = vld [vmem:[%s5 + $0x1c] sm:$0xf]
  %v673 = vld [vmem:[%s6] sm:$0x1]
  %v675 = vlaneseq
  %v676 = vshrl.u32 %v675, 7
  %v677 = vsub.s32 0, %v676
  %v678 = vrot.slane %v673, %v677
  %v688 = vunpack.c.l.b16 %v665
  %v689 = vunpack.c.l.b16 %v666
  %v690 = vunpack.c.l.b16 %v667
  %v691 = vunpack.c.l.b16 %v668
  %v692 = vunpack.c.l.b16 %v669
  %v693 = vunpack.c.l.b16 %v670
  %v694 = vunpack.c.l.b16 %v671
  %v695 = vunpack.c.l.b16 %v672
  %v696 = vpack.c.b16 %v689, %v688
  %v697 = vpack.c.b16 %v691, %v690
  %v698 = vpack.c.b16 %v693, %v692
  %v699 = vpack.c.b16 %v695, %v694
  %v705 = vsel %vm407, %v649, 0
  %v708 = vsel %vm407, %v650, 0
  %v711 = vsel %vm407, %v651, 0
  %v714 = vsel %vm407, %v652, 0
  %v717 = vsel %vm407, %v653, 0
  %v720 = vsel %vm407, %v654, 0
  %v723 = vsel %vm407, %v655, 0
  %v726 = vsel %vm407, %v656, 0
  %v729 = vsel %vm407, %v657, 0
  %v732 = vsel %vm407, %v658, 0
  %v735 = vsel %vm407, %v659, 0
  %v738 = vsel %vm407, %v660, 0
  %v741 = vsel %vm407, %v661, 0
  %v744 = vsel %vm407, %v662, 0
  %v747 = vsel %vm407, %v663, 0
  %v750 = vsel %vm407, %v664, 0
  %752 = vmatprep.subr.bf16.mxu0 0
  %753 = vmatpush1.bf16.msra.mxu0 0
  %754 = vmatprep.subr.bf16.mxu0 0
  %755 = vmatpush1.bf16.msra.mxu0 0
  %756 = vmatprep.subr.bf16.mxu0 0
  %757 = vmatpush1.bf16.msra.mxu0 0
  %758 = vmatprep.subr.bf16.mxu0 0
  %759 = vmatpush1.bf16.msra.mxu0 0
  %760 = vmatprep.subr.bf16.mxu0 0
  %761 = vmatpush1.bf16.msra.mxu0 %v699
  %762 = vmatprep.subr.bf16.mxu0 0
  %763 = vmatpush1.bf16.msra.mxu0 %v698
  %764 = vmatprep.subr.bf16.mxu0 0
  %765 = vmatpush1.bf16.msra.mxu0 %v697
  %766 = vmatprep.subr.bf16.mxu0 0
  %767 = vmatpush1.bf16.msra.mxu0 %v696
  %768 = vmatprep.subr.bf16.mxu0 0
  %769 = vmatpush2.bf16.msra.mxu0 0
  %770 = vmatprep.subr.bf16.mxu0 0
  %771 = vmatpush2.bf16.msra.mxu0 0
  %772 = vmatprep.subr.bf16.mxu0 0
  %773 = vmatpush2.bf16.msra.mxu0 0
  %774 = vmatprep.subr.bf16.mxu0 0
  %775 = vmatpush2.bf16.msra.mxu0 0
  %776 = vmatprep.subr.bf16.mxu0 0
  %777 = vmatpush2.bf16.msra.mxu0 0
  %778 = vmatprep.subr.bf16.mxu0 0
  %779 = vmatpush2.bf16.msra.mxu0 0
  %780 = vmatprep.subr.bf16.mxu0 0
  %781 = vmatpush2.bf16.msra.mxu0 0
  %782 = vmatprep.subr.bf16.mxu0 0
  %783 = vmatpush2.bf16.msra.mxu0 0
  %784 = vmatprep.mubr.bf16.mxu0 0
  %785 = vmatmul.mubr.bf16.gmra.mxu0 %v705
  %v786 = vpop.f32.mrf.mxu0
  %v787 = vadd.f32 %v678, %v786
  %v788 = vpop.f32.mrf.mxu0
  %v789 = vpop.f32.mrf.mxu0
  %v790 = vadd.f32 %v678, %v789
  %v791 = vpop.f32.mrf.mxu0
  %792 = vmatprep.mubr.bf16.mxu0 0
  %793 = vmatmul.mubr.bf16.gmra.mxu0 %v708
  %v794 = vpop.f32.mrf.mxu0
  %v795 = vadd.f32 %v678, %v794
  %v796 = vpop.f32.mrf.mxu0
  %v797 = vpop.f32.mrf.mxu0
  %v798 = vadd.f32 %v678, %v797
  %v799 = vpop.f32.mrf.mxu0
  %800 = vmatprep.mubr.bf16.mxu0 0
  %801 = vmatmul.mubr.bf16.gmra.mxu0 %v711
  %v802 = vpop.f32.mrf.mxu0
  %v803 = vadd.f32 %v678, %v802
  %v804 = vpop.f32.mrf.mxu0
  %v805 = vpop.f32.mrf.mxu0
  %v806 = vadd.f32 %v678, %v805
  %v807 = vpop.f32.mrf.mxu0
  %808 = vmatprep.mubr.bf16.mxu0 0
  %809 = vmatmul.mubr.bf16.gmra.mxu0 %v714
  %v810 = vpop.f32.mrf.mxu0
  %v811 = vadd.f32 %v678, %v810
  %v812 = vpop.f32.mrf.mxu0
  %v813 = vpop.f32.mrf.mxu0
  %v814 = vadd.f32 %v678, %v813
  %v815 = vpop.f32.mrf.mxu0
  %816 = vmatprep.mubr.bf16.mxu0 0
  %817 = vmatmul.mubr.bf16.gmra.mxu0 %v717
  %v818 = vpop.f32.mrf.mxu0
  %v819 = vadd.f32 %v678, %v818
  %v820 = vpop.f32.mrf.mxu0
  %v821 = vpop.f32.mrf.mxu0
  %v822 = vadd.f32 %v678, %v821
  %v823 = vpop.f32.mrf.mxu0
  %824 = vmatprep.mubr.bf16.mxu0 0
  %825 = vmatmul.mubr.bf16.gmra.mxu0 %v720
  %v826 = vpop.f32.mrf.mxu0
  %v827 = vadd.f32 %v678, %v826
  %v828 = vpop.f32.mrf.mxu0
  %v829 = vpop.f32.mrf.mxu0
  %v830 = vadd.f32 %v678, %v829
  %v831 = vpop.f32.mrf.mxu0
  %832 = vmatprep.mubr.bf16.mxu0 0
  %833 = vmatmul.mubr.bf16.gmra.mxu0 %v723
  %v834 = vpop.f32.mrf.mxu0
  %v835 = vadd.f32 %v678, %v834
  %v836 = vpop.f32.mrf.mxu0
  %v837 = vpop.f32.mrf.mxu0
  %v838 = vadd.f32 %v678, %v837
  %v839 = vpop.f32.mrf.mxu0
  %840 = vmatprep.mubr.bf16.mxu0 0
  %841 = vmatmul.mubr.bf16.gmra.mxu0 %v726
  %v842 = vpop.f32.mrf.mxu0
  %v843 = vadd.f32 %v678, %v842
  %v844 = vpop.f32.mrf.mxu0
  %v845 = vpop.f32.mrf.mxu0
  %v846 = vadd.f32 %v678, %v845
  %v847 = vpop.f32.mrf.mxu0
  %848 = vmatprep.mubr.bf16.mxu0 0
  %849 = vmatmul.mubr.bf16.gmra.mxu0 %v729
  %v850 = vpop.f32.mrf.mxu0
  %v851 = vadd.f32 %v678, %v850
  %v852 = vpop.f32.mrf.mxu0
  %v853 = vpop.f32.mrf.mxu0
  %v854 = vadd.f32 %v678, %v853
  %v855 = vpop.f32.mrf.mxu0
  %856 = vmatprep.mubr.bf16.mxu0 0
  %857 = vmatmul.mubr.bf16.gmra.mxu0 %v732
  %v858 = vpop.f32.mrf.mxu0
  %v859 = vadd.f32 %v678, %v858
  %v860 = vpop.f32.mrf.mxu0
  %v861 = vpop.f32.mrf.mxu0
  %v862 = vadd.f32 %v678, %v861
  %v863 = vpop.f32.mrf.mxu0
  %864 = vmatprep.mubr.bf16.mxu0 0
  %865 = vmatmul.mubr.bf16.gmra.mxu0 %v735
  %v866 = vpop.f32.mrf.mxu0
  %v867 = vadd.f32 %v678, %v866
  %v868 = vpop.f32.mrf.mxu0
  %v869 = vpop.f32.mrf.mxu0
  %v870 = vadd.f32 %v678, %v869
  %v871 = vpop.f32.mrf.mxu0
  %872 = vmatprep.mubr.bf16.mxu0 0
  %873 = vmatmul.mubr.bf16.gmra.mxu0 %v738
  %v874 = vpop.f32.mrf.mxu0
  %v875 = vadd.f32 %v678, %v874
  %v876 = vpop.f32.mrf.mxu0
  %v877 = vpop.f32.mrf.mxu0
  %v878 = vadd.f32 %v678, %v877
  %v879 = vpop.f32.mrf.mxu0
  %880 = vmatprep.mubr.bf16.mxu0 0
  %881 = vmatmul.mubr.bf16.gmra.mxu0 %v741
  %v882 = vpop.f32.mrf.mxu0
  %v883 = vadd.f32 %v678, %v882
  %v884 = vpop.f32.mrf.mxu0
  %v885 = vpop.f32.mrf.mxu0
  %v886 = vadd.f32 %v678, %v885
  %v887 = vpop.f32.mrf.mxu0
  %888 = vmatprep.mubr.bf16.mxu0 0
  %889 = vmatmul.mubr.bf16.gmra.mxu0 %v744
  %v890 = vpop.f32.mrf.mxu0
  %v891 = vadd.f32 %v678, %v890
  %v892 = vpop.f32.mrf.mxu0
  %v893 = vpop.f32.mrf.mxu0
  %v894 = vadd.f32 %v678, %v893
  %v895 = vpop.f32.mrf.mxu0
  %896 = vmatprep.mubr.bf16.mxu0 0
  %897 = vmatmul.mubr.bf16.gmra.mxu0 %v747
  %v898 = vpop.f32.mrf.mxu0
  %v899 = vadd.f32 %v678, %v898
  %v900 = vpop.f32.mrf.mxu0
  %v901 = vpop.f32.mrf.mxu0
  %v902 = vadd.f32 %v678, %v901
  %v903 = vpop.f32.mrf.mxu0
  %904 = vmatprep.mubr.bf16.mxu0 0
  %905 = vmatmul.mubr.bf16.gmra.mxu0 %v750
  %v906 = vpop.f32.mrf.mxu0
  %v907 = vadd.f32 %v678, %v906
  %v908 = vpop.f32.mrf.mxu0
  %v909 = vpop.f32.mrf.mxu0
  %v910 = vadd.f32 %v678, %v909
  %v911 = vpop.f32.mrf.mxu0
  %912 = vdwg.mxu0
  %v913 = vmax.f32 %v787, 0.0
  %v914 = vmax.f32 %v790, 0.0
  %v915 = vmax.f32 %v795, 0.0
  %v916 = vmax.f32 %v798, 0.0
  %v917 = vmax.f32 %v803, 0.0
  %v918 = vmax.f32 %v806, 0.0
  %v919 = vmax.f32 %v811, 0.0
  %v920 = vmax.f32 %v814, 0.0
  %v921 = vmax.f32 %v819, 0.0
  %v922 = vmax.f32 %v822, 0.0
  %v923 = vmax.f32 %v827, 0.0
  %v924 = vmax.f32 %v830, 0.0
  %v925 = vmax.f32 %v835, 0.0
  %v926 = vmax.f32 %v838, 0.0
  %v927 = vmax.f32 %v843, 0.0
  %v928 = vmax.f32 %v846, 0.0
  %v929 = vmax.f32 %v851, 0.0
  %v930 = vmax.f32 %v854, 0.0
  %v931 = vmax.f32 %v859, 0.0
  %v932 = vmax.f32 %v862, 0.0
  %v933 = vmax.f32 %v867, 0.0
  %v934 = vmax.f32 %v870, 0.0
  %v935 = vmax.f32 %v875, 0.0
  %v936 = vmax.f32 %v878, 0.0
  %v937 = vmax.f32 %v883, 0.0
  %v938 = vmax.f32 %v886, 0.0
  %v939 = vmax.f32 %v891, 0.0
  %v940 = vmax.f32 %v894, 0.0
  %v941 = vmax.f32 %v899, 0.0
  %v942 = vmax.f32 %v902, 0.0
  %v943 = vmax.f32 %v907, 0.0
  %v944 = vmax.f32 %v910, 0.0
  %v945 = vpack.c.bf16 %v914, %v913
  %v946 = vpack.c.bf16 %v916, %v915
  %v947 = vpack.c.bf16 %v918, %v917
  %v948 = vpack.c.bf16 %v920, %v919
  %v949 = vpack.c.bf16 %v922, %v921
  %v950 = vpack.c.bf16 %v924, %v923
  %v951 = vpack.c.bf16 %v926, %v925
  %v952 = vpack.c.bf16 %v928, %v927
  %v953 = vpack.c.bf16 %v930, %v929
  %v954 = vpack.c.bf16 %v932, %v931
  %v955 = vpack.c.bf16 %v934, %v933
  %v956 = vpack.c.bf16 %v936, %v935
  %v957 = vpack.c.bf16 %v938, %v937
  %v958 = vpack.c.bf16 %v940, %v939
  %v959 = vpack.c.bf16 %v942, %v941
  %v960 = vpack.c.bf16 %v944, %v943
  %v961 = vld [vmem:[%s7] sm:$0xf]
  %v962 = vld [vmem:[%s7 + $0x4] sm:$0xf]
  %v963 = vld [vmem:[%s7 + $0x8] sm:$0xf]
  %v964 = vld [vmem:[%s7 + $0xc] sm:$0xf]
  %v965 = vld [vmem:[%s8] sm:$0x1]
  %v967 = vlaneseq
  %v968 = vshrl.u32 %v967, 7
  %v969 = vsub.s32 0, %v968
  %v970 = vrot.slane %v965, %v969
  %v976 = vunpack.c.l.b16 %v961
  %v977 = vunpack.c.l.b16 %v962
  %v978 = vunpack.c.l.b16 %v963
  %v979 = vunpack.c.l.b16 %v964
  %v980 = vpack.c.b16 %v977, %v976
  %v981 = vpack.c.b16 %v979, %v978
  %v985 = vsel %vm110, %v945, 0
  %v988 = vsel %vm110, %v946, 0
  %v991 = vsel %vm110, %v947, 0
  %v994 = vsel %vm110, %v948, 0
  %v997 = vsel %vm110, %v949, 0
  %v1000 = vsel %vm110, %v950, 0
  %v1003 = vsel %vm110, %v951, 0
  %v1006 = vsel %vm110, %v952, 0
  %v1009 = vsel %vm110, %v953, 0
  %v1012 = vsel %vm110, %v954, 0
  %v1015 = vsel %vm110, %v955, 0
  %v1018 = vsel %vm110, %v956, 0
  %v1021 = vsel %vm110, %v957, 0
  %v1024 = vsel %vm110, %v958, 0
  %v1027 = vsel %vm110, %v959, 0
  %v1030 = vsel %vm110, %v960, 0
  %1032 = vmatprep.subr.bf16.mxu0 0
  %1033 = vmatpush1.bf16.msra.mxu0 0
  %1034 = vmatprep.subr.bf16.mxu0 0
  %1035 = vmatpush1.bf16.msra.mxu0 0
  %1036 = vmatprep.subr.bf16.mxu0 0
  %1037 = vmatpush1.bf16.msra.mxu0 0
  %1038 = vmatprep.subr.bf16.mxu0 0
  %1039 = vmatpush1.bf16.msra.mxu0 0
  %1040 = vmatprep.subr.bf16.mxu0 0
  %1041 = vmatpush1.bf16.msra.mxu0 0
  %1042 = vmatprep.subr.bf16.mxu0 0
  %1043 = vmatpush1.bf16.msra.mxu0 0
  %1044 = vmatprep.subr.bf16.mxu0 0
  %1045 = vmatpush1.bf16.msra.mxu0 %v981
  %1046 = vmatprep.subr.bf16.mxu0 0
  %1047 = vmatpush1.bf16.msra.mxu0 %v980
  %1048 = vmatprep.subr.bf16.mxu0 0
  %1049 = vmatpush2.bf16.msra.mxu0 0
  %1050 = vmatprep.subr.bf16.mxu0 0
  %1051 = vmatpush2.bf16.msra.mxu0 0
  %1052 = vmatprep.subr.bf16.mxu0 0
  %1053 = vmatpush2.bf16.msra.mxu0 0
  %1054 = vmatprep.subr.bf16.mxu0 0
  %1055 = vmatpush2.bf16.msra.mxu0 0
  %1056 = vmatprep.subr.bf16.mxu0 0
  %1057 = vmatpush2.bf16.msra.mxu0 0
  %1058 = vmatprep.subr.bf16.mxu0 0
  %1059 = vmatpush2.bf16.msra.mxu0 0
  %1060 = vmatprep.subr.bf16.mxu0 0
  %1061 = vmatpush2.bf16.msra.mxu0 0
  %1062 = vmatprep.subr.bf16.mxu0 0
  %1063 = vmatpush2.bf16.msra.mxu0 0
  %1064 = vmatprep.mubr.bf16.mxu0 0
  %1065 = vmatmul.mubr.bf16.gmra.mxu0 %v985
  %v1066 = vpop.f32.mrf.mxu0
  %v1067 = vadd.f32 %v970, %v1066
  %v1068 = vpop.f32.mrf.mxu0
  %v1069 = vpop.f32.mrf.mxu0
  %v1070 = vadd.f32 %v970, %v1069
  %v1071 = vpop.f32.mrf.mxu0
  %1072 = vmatprep.mubr.bf16.mxu0 0
  %1073 = vmatmul.mubr.bf16.gmra.mxu0 %v988
  %v1074 = vpop.f32.mrf.mxu0
  %v1075 = vadd.f32 %v970, %v1074
  %v1076 = vpop.f32.mrf.mxu0
  %v1077 = vpop.f32.mrf.mxu0
  %v1078 = vadd.f32 %v970, %v1077
  %v1079 = vpop.f32.mrf.mxu0
  %1080 = vmatprep.mubr.bf16.mxu0 0
  %1081 = vmatmul.mubr.bf16.gmra.mxu0 %v991
  %v1082 = vpop.f32.mrf.mxu0
  %v1083 = vadd.f32 %v970, %v1082
  %v1084 = vpop.f32.mrf.mxu0
  %v1085 = vpop.f32.mrf.mxu0
  %v1086 = vadd.f32 %v970, %v1085
  %v1087 = vpop.f32.mrf.mxu0
  %1088 = vmatprep.mubr.bf16.mxu0 0
  %1089 = vmatmul.mubr.bf16.gmra.mxu0 %v994
  %v1090 = vpop.f32.mrf.mxu0
  %v1091 = vadd.f32 %v970, %v1090
  %v1092 = vpop.f32.mrf.mxu0
  %v1093 = vpop.f32.mrf.mxu0
  %v1094 = vadd.f32 %v970, %v1093
  %v1095 = vpop.f32.mrf.mxu0
  %1096 = vmatprep.mubr.bf16.mxu0 0
  %1097 = vmatmul.mubr.bf16.gmra.mxu0 %v997
  %v1098 = vpop.f32.mrf.mxu0
  %v1099 = vadd.f32 %v970, %v1098
  %v1100 = vpop.f32.mrf.mxu0
  %v1101 = vpop.f32.mrf.mxu0
  %v1102 = vadd.f32 %v970, %v1101
  %v1103 = vpop.f32.mrf.mxu0
  %1104 = vmatprep.mubr.bf16.mxu0 0
  %1105 = vmatmul.mubr.bf16.gmra.mxu0 %v1000
  %v1106 = vpop.f32.mrf.mxu0
  %v1107 = vadd.f32 %v970, %v1106
  %v1108 = vpop.f32.mrf.mxu0
  %v1109 = vpop.f32.mrf.mxu0
  %v1110 = vadd.f32 %v970, %v1109
  %v1111 = vpop.f32.mrf.mxu0
  %1112 = vmatprep.mubr.bf16.mxu0 0
  %1113 = vmatmul.mubr.bf16.gmra.mxu0 %v1003
  %v1114 = vpop.f32.mrf.mxu0
  %v1115 = vadd.f32 %v970, %v1114
  %v1116 = vpop.f32.mrf.mxu0
  %v1117 = vpop.f32.mrf.mxu0
  %v1118 = vadd.f32 %v970, %v1117
  %v1119 = vpop.f32.mrf.mxu0
  %1120 = vmatprep.mubr.bf16.mxu0 0
  %1121 = vmatmul.mubr.bf16.gmra.mxu0 %v1006
  %v1122 = vpop.f32.mrf.mxu0
  %v1123 = vadd.f32 %v970, %v1122
  %v1124 = vpop.f32.mrf.mxu0
  %v1125 = vpop.f32.mrf.mxu0
  %v1126 = vadd.f32 %v970, %v1125
  %v1127 = vpop.f32.mrf.mxu0
  %1128 = vmatprep.mubr.bf16.mxu0 0
  %1129 = vmatmul.mubr.bf16.gmra.mxu0 %v1009
  %v1130 = vpop.f32.mrf.mxu0
  %v1131 = vadd.f32 %v970, %v1130
  %v1132 = vpop.f32.mrf.mxu0
  %v1133 = vpop.f32.mrf.mxu0
  %v1134 = vadd.f32 %v970, %v1133
  %v1135 = vpop.f32.mrf.mxu0
  %1136 = vmatprep.mubr.bf16.mxu0 0
  %1137 = vmatmul.mubr.bf16.gmra.mxu0 %v1012
  %v1138 = vpop.f32.mrf.mxu0
  %v1139 = vadd.f32 %v970, %v1138
  %v1140 = vpop.f32.mrf.mxu0
  %v1141 = vpop.f32.mrf.mxu0
  %v1142 = vadd.f32 %v970, %v1141
  %v1143 = vpop.f32.mrf.mxu0
  %1144 = vmatprep.mubr.bf16.mxu0 0
  %1145 = vmatmul.mubr.bf16.gmra.mxu0 %v1015
  %v1146 = vpop.f32.mrf.mxu0
  %v1147 = vadd.f32 %v970, %v1146
  %v1148 = vpop.f32.mrf.mxu0
  %v1149 = vpop.f32.mrf.mxu0
  %v1150 = vadd.f32 %v970, %v1149
  %v1151 = vpop.f32.mrf.mxu0
  %1152 = vmatprep.mubr.bf16.mxu0 0
  %1153 = vmatmul.mubr.bf16.gmra.mxu0 %v1018
  %v1154 = vpop.f32.mrf.mxu0
  %v1155 = vadd.f32 %v970, %v1154
  %v1156 = vpop.f32.mrf.mxu0
  %v1157 = vpop.f32.mrf.mxu0
  %v1158 = vadd.f32 %v970, %v1157
  %v1159 = vpop.f32.mrf.mxu0
  %1160 = vmatprep.mubr.bf16.mxu0 0
  %1161 = vmatmul.mubr.bf16.gmra.mxu0 %v1021
  %v1162 = vpop.f32.mrf.mxu0
  %v1163 = vadd.f32 %v970, %v1162
  %v1164 = vpop.f32.mrf.mxu0
  %v1165 = vpop.f32.mrf.mxu0
  %v1166 = vadd.f32 %v970, %v1165
  %v1167 = vpop.f32.mrf.mxu0
  %1168 = vmatprep.mubr.bf16.mxu0 0
  %1169 = vmatmul.mubr.bf16.gmra.mxu0 %v1024
  %v1170 = vpop.f32.mrf.mxu0
  %v1171 = vadd.f32 %v970, %v1170
  %v1172 = vpop.f32.mrf.mxu0
  %v1173 = vpop.f32.mrf.mxu0
  %v1174 = vadd.f32 %v970, %v1173
  %v1175 = vpop.f32.mrf.mxu0
  %1176 = vmatprep.mubr.bf16.mxu0 0
  %1177 = vmatmul.mubr.bf16.gmra.mxu0 %v1027
  %v1178 = vpop.f32.mrf.mxu0
  %v1179 = vadd.f32 %v970, %v1178
  %v1180 = vpop.f32.mrf.mxu0
  %v1181 = vpop.f32.mrf.mxu0
  %v1182 = vadd.f32 %v970, %v1181
  %v1183 = vpop.f32.mrf.mxu0
  %1184 = vmatprep.mubr.bf16.mxu0 0
  %1185 = vmatmul.mubr.bf16.gmra.mxu0 %v1030
  %v1186 = vpop.f32.mrf.mxu0
  %v1187 = vadd.f32 %v970, %v1186
  %v1188 = vpop.f32.mrf.mxu0
  %v1189 = vpop.f32.mrf.mxu0
  %v1190 = vadd.f32 %v970, %v1189
  %v1191 = vpop.f32.mrf.mxu0
  %1192 = vdwg.mxu0
  %v1193 = vmax.f32 %v1067, 0.0
  %v1194 = vmax.f32 %v1070, 0.0
  %v1195 = vmax.f32 %v1075, 0.0
  %v1196 = vmax.f32 %v1078, 0.0
  %v1197 = vmax.f32 %v1083, 0.0
  %v1198 = vmax.f32 %v1086, 0.0
  %v1199 = vmax.f32 %v1091, 0.0
  %v1200 = vmax.f32 %v1094, 0.0
  %v1201 = vmax.f32 %v1099, 0.0
  %v1202 = vmax.f32 %v1102, 0.0
  %v1203 = vmax.f32 %v1107, 0.0
  %v1204 = vmax.f32 %v1110, 0.0
  %v1205 = vmax.f32 %v1115, 0.0
  %v1206 = vmax.f32 %v1118, 0.0
  %v1207 = vmax.f32 %v1123, 0.0
  %v1208 = vmax.f32 %v1126, 0.0
  %v1209 = vmax.f32 %v1131, 0.0
  %v1210 = vmax.f32 %v1134, 0.0
  %v1211 = vmax.f32 %v1139, 0.0
  %v1212 = vmax.f32 %v1142, 0.0
  %v1213 = vmax.f32 %v1147, 0.0
  %v1214 = vmax.f32 %v1150, 0.0
  %v1215 = vmax.f32 %v1155, 0.0
  %v1216 = vmax.f32 %v1158, 0.0
  %v1217 = vmax.f32 %v1163, 0.0
  %v1218 = vmax.f32 %v1166, 0.0
  %v1219 = vmax.f32 %v1171, 0.0
  %v1220 = vmax.f32 %v1174, 0.0
  %v1221 = vmax.f32 %v1179, 0.0
  %v1222 = vmax.f32 %v1182, 0.0
  %v1223 = vmax.f32 %v1187, 0.0
  %v1224 = vmax.f32 %v1190, 0.0
  %v1225 = vpack.c.bf16 %v1194, %v1193
  %v1226 = vpack.c.bf16 %v1196, %v1195
  %v1227 = vpack.c.bf16 %v1198, %v1197
  %v1228 = vpack.c.bf16 %v1200, %v1199
  %v1229 = vpack.c.bf16 %v1202, %v1201
  %v1230 = vpack.c.bf16 %v1204, %v1203
  %v1231 = vpack.c.bf16 %v1206, %v1205
  %v1232 = vpack.c.bf16 %v1208, %v1207
  %v1233 = vpack.c.bf16 %v1210, %v1209
  %v1234 = vpack.c.bf16 %v1212, %v1211
  %v1235 = vpack.c.bf16 %v1214, %v1213
  %v1236 = vpack.c.bf16 %v1216, %v1215
  %v1237 = vpack.c.bf16 %v1218, %v1217
  %v1238 = vpack.c.bf16 %v1220, %v1219
  %v1239 = vpack.c.bf16 %v1222, %v1221
  %v1240 = vpack.c.bf16 %v1224, %v1223
  %v1241 = vld [vmem:[%s9] sm:$0xf]
  %v1242 = vld [vmem:[%s9 + $0x4] sm:$0xf]
  %v1243 = vld [vmem:[%s9 + $0x8] sm:$0xf]
  %v1244 = vld [vmem:[%s9 + $0xc] sm:$0xf]
  %v1245 = vld [vmem:[%s10] sm:$0x1]
  %v1247 = vlaneseq
  %v1248 = vshrl.u32 %v1247, 7
  %v1249 = vsub.s32 0, %v1248
  %v1250 = vrot.slane %v1245, %v1249
  %v1256 = vunpack.c.l.b16 %v1241
  %v1257 = vunpack.c.l.b16 %v1242
  %v1258 = vunpack.c.l.b16 %v1243
  %v1259 = vunpack.c.l.b16 %v1244
  %v1260 = vpack.c.b16 %v1257, %v1256
  %v1261 = vpack.c.b16 %v1259, %v1258
  %v1265 = vsel %vm110, %v1225, 0
  %v1268 = vsel %vm110, %v1226, 0
  %v1271 = vsel %vm110, %v1227, 0
  %v1274 = vsel %vm110, %v1228, 0
  %v1277 = vsel %vm110, %v1229, 0
  %v1280 = vsel %vm110, %v1230, 0
  %v1283 = vsel %vm110, %v1231, 0
  %v1286 = vsel %vm110, %v1232, 0
  %v1289 = vsel %vm110, %v1233, 0
  %v1292 = vsel %vm110, %v1234, 0
  %v1295 = vsel %vm110, %v1235, 0
  %v1298 = vsel %vm110, %v1236, 0
  %v1301 = vsel %vm110, %v1237, 0
  %v1304 = vsel %vm110, %v1238, 0
  %v1307 = vsel %vm110, %v1239, 0
  %v1310 = vsel %vm110, %v1240, 0
  %1312 = vmatprep.subr.bf16.mxu0 0
  %1313 = vmatpush1.bf16.msra.mxu0 0
  %1314 = vmatprep.subr.bf16.mxu0 0
  %1315 = vmatpush1.bf16.msra.mxu0 0
  %1316 = vmatprep.subr.bf16.mxu0 0
  %1317 = vmatpush1.bf16.msra.mxu0 0
  %1318 = vmatprep.subr.bf16.mxu0 0
  %1319 = vmatpush1.bf16.msra.mxu0 0
  %1320 = vmatprep.subr.bf16.mxu0 0
  %1321 = vmatpush1.bf16.msra.mxu0 0
  %1322 = vmatprep.subr.bf16.mxu0 0
  %1323 = vmatpush1.bf16.msra.mxu0 0
  %1324 = vmatprep.subr.bf16.mxu0 0
  %1325 = vmatpush1.bf16.msra.mxu0 %v1261
  %1326 = vmatprep.subr.bf16.mxu0 0
  %1327 = vmatpush1.bf16.msra.mxu0 %v1260
  %1328 = vmatprep.subr.bf16.mxu0 0
  %1329 = vmatpush2.bf16.msra.mxu0 0
  %1330 = vmatprep.subr.bf16.mxu0 0
  %1331 = vmatpush2.bf16.msra.mxu0 0
  %1332 = vmatprep.subr.bf16.mxu0 0
  %1333 = vmatpush2.bf16.msra.mxu0 0
  %1334 = vmatprep.subr.bf16.mxu0 0
  %1335 = vmatpush2.bf16.msra.mxu0 0
  %1336 = vmatprep.subr.bf16.mxu0 0
  %1337 = vmatpush2.bf16.msra.mxu0 0
  %1338 = vmatprep.subr.bf16.mxu0 0
  %1339 = vmatpush2.bf16.msra.mxu0 0
  %1340 = vmatprep.subr.bf16.mxu0 0
  %1341 = vmatpush2.bf16.msra.mxu0 0
  %1342 = vmatprep.subr.bf16.mxu0 0
  %1343 = vmatpush2.bf16.msra.mxu0 0
  %1344 = vmatprep.mubr.bf16.mxu0 0
  %1345 = vmatmul.mubr.bf16.gmra.mxu0 %v1265
  %v1346 = vpop.f32.mrf.mxu0
  %v1347 = vadd.f32 %v1250, %v1346
  %v1348 = vpop.f32.mrf.mxu0
  %v1349 = vpop.f32.mrf.mxu0
  %v1350 = vadd.f32 %v1250, %v1349
  %v1351 = vpop.f32.mrf.mxu0
  %1352 = vmatprep.mubr.bf16.mxu0 0
  %1353 = vmatmul.mubr.bf16.gmra.mxu0 %v1268
  %v1354 = vpop.f32.mrf.mxu0
  %v1355 = vadd.f32 %v1250, %v1354
  %v1356 = vpop.f32.mrf.mxu0
  %v1357 = vpop.f32.mrf.mxu0
  %v1358 = vadd.f32 %v1250, %v1357
  %v1359 = vpop.f32.mrf.mxu0
  %1360 = vmatprep.mubr.bf16.mxu0 0
  %1361 = vmatmul.mubr.bf16.gmra.mxu0 %v1271
  %v1362 = vpop.f32.mrf.mxu0
  %v1363 = vadd.f32 %v1250, %v1362
  %v1364 = vpop.f32.mrf.mxu0
  %v1365 = vpop.f32.mrf.mxu0
  %v1366 = vadd.f32 %v1250, %v1365
  %v1367 = vpop.f32.mrf.mxu0
  %1368 = vmatprep.mubr.bf16.mxu0 0
  %1369 = vmatmul.mubr.bf16.gmra.mxu0 %v1274
  %v1370 = vpop.f32.mrf.mxu0
  %v1371 = vadd.f32 %v1250, %v1370
  %v1372 = vpop.f32.mrf.mxu0
  %v1373 = vpop.f32.mrf.mxu0
  %v1374 = vadd.f32 %v1250, %v1373
  %v1375 = vpop.f32.mrf.mxu0
  %1376 = vmatprep.mubr.bf16.mxu0 0
  %1377 = vmatmul.mubr.bf16.gmra.mxu0 %v1277
  %v1378 = vpop.f32.mrf.mxu0
  %v1379 = vadd.f32 %v1250, %v1378
  %v1380 = vpop.f32.mrf.mxu0
  %v1381 = vpop.f32.mrf.mxu0
  %v1382 = vadd.f32 %v1250, %v1381
  %v1383 = vpop.f32.mrf.mxu0
  %1384 = vmatprep.mubr.bf16.mxu0 0
  %1385 = vmatmul.mubr.bf16.gmra.mxu0 %v1280
  %v1386 = vpop.f32.mrf.mxu0
  %v1387 = vadd.f32 %v1250, %v1386
  %v1388 = vpop.f32.mrf.mxu0
  %v1389 = vpop.f32.mrf.mxu0
  %v1390 = vadd.f32 %v1250, %v1389
  %v1391 = vpop.f32.mrf.mxu0
  %1392 = vmatprep.mubr.bf16.mxu0 0
  %1393 = vmatmul.mubr.bf16.gmra.mxu0 %v1283
  %v1394 = vpop.f32.mrf.mxu0
  %v1395 = vadd.f32 %v1250, %v1394
  %v1396 = vpop.f32.mrf.mxu0
  %v1397 = vpop.f32.mrf.mxu0
  %v1398 = vadd.f32 %v1250, %v1397
  %v1399 = vpop.f32.mrf.mxu0
  %1400 = vmatprep.mubr.bf16.mxu0 0
  %1401 = vmatmul.mubr.bf16.gmra.mxu0 %v1286
  %v1402 = vpop.f32.mrf.mxu0
  %v1403 = vadd.f32 %v1250, %v1402
  %v1404 = vpop.f32.mrf.mxu0
  %v1405 = vpop.f32.mrf.mxu0
  %v1406 = vadd.f32 %v1250, %v1405
  %v1407 = vpop.f32.mrf.mxu0
  %1408 = vmatprep.mubr.bf16.mxu0 0
  %1409 = vmatmul.mubr.bf16.gmra.mxu0 %v1289
  %v1410 = vpop.f32.mrf.mxu0
  %v1411 = vadd.f32 %v1250, %v1410
  %v1412 = vpop.f32.mrf.mxu0
  %v1413 = vpop.f32.mrf.mxu0
  %v1414 = vadd.f32 %v1250, %v1413
  %v1415 = vpop.f32.mrf.mxu0
  %1416 = vmatprep.mubr.bf16.mxu0 0
  %1417 = vmatmul.mubr.bf16.gmra.mxu0 %v1292
  %v1418 = vpop.f32.mrf.mxu0
  %v1419 = vadd.f32 %v1250, %v1418
  %v1420 = vpop.f32.mrf.mxu0
  %v1421 = vpop.f32.mrf.mxu0
  %v1422 = vadd.f32 %v1250, %v1421
  %v1423 = vpop.f32.mrf.mxu0
  %1424 = vmatprep.mubr.bf16.mxu0 0
  %1425 = vmatmul.mubr.bf16.gmra.mxu0 %v1295
  %v1426 = vpop.f32.mrf.mxu0
  %v1427 = vadd.f32 %v1250, %v1426
  %v1428 = vpop.f32.mrf.mxu0
  %v1429 = vpop.f32.mrf.mxu0
  %v1430 = vadd.f32 %v1250, %v1429
  %v1431 = vpop.f32.mrf.mxu0
  %1432 = vmatprep.mubr.bf16.mxu0 0
  %1433 = vmatmul.mubr.bf16.gmra.mxu0 %v1298
  %v1434 = vpop.f32.mrf.mxu0
  %v1435 = vadd.f32 %v1250, %v1434
  %v1436 = vpop.f32.mrf.mxu0
  %v1437 = vpop.f32.mrf.mxu0
  %v1438 = vadd.f32 %v1250, %v1437
  %v1439 = vpop.f32.mrf.mxu0
  %1440 = vmatprep.mubr.bf16.mxu0 0
  %1441 = vmatmul.mubr.bf16.gmra.mxu0 %v1301
  %v1442 = vpop.f32.mrf.mxu0
  %v1443 = vadd.f32 %v1250, %v1442
  %v1444 = vpop.f32.mrf.mxu0
  %v1445 = vpop.f32.mrf.mxu0
  %v1446 = vadd.f32 %v1250, %v1445
  %v1447 = vpop.f32.mrf.mxu0
  %1448 = vmatprep.mubr.bf16.mxu0 0
  %1449 = vmatmul.mubr.bf16.gmra.mxu0 %v1304
  %v1450 = vpop.f32.mrf.mxu0
  %v1451 = vadd.f32 %v1250, %v1450
  %v1452 = vpop.f32.mrf.mxu0
  %v1453 = vpop.f32.mrf.mxu0
  %v1454 = vadd.f32 %v1250, %v1453
  %v1455 = vpop.f32.mrf.mxu0
  %1456 = vmatprep.mubr.bf16.mxu0 0
  %1457 = vmatmul.mubr.bf16.gmra.mxu0 %v1307
  %v1458 = vpop.f32.mrf.mxu0
  %v1459 = vadd.f32 %v1250, %v1458
  %v1460 = vpop.f32.mrf.mxu0
  %v1461 = vpop.f32.mrf.mxu0
  %v1462 = vadd.f32 %v1250, %v1461
  %v1463 = vpop.f32.mrf.mxu0
  %1464 = vmatprep.mubr.bf16.mxu0 0
  %1465 = vmatmul.mubr.bf16.gmra.mxu0 %v1310
  %v1466 = vpop.f32.mrf.mxu0
  %v1467 = vadd.f32 %v1250, %v1466
  %v1468 = vpop.f32.mrf.mxu0
  %v1469 = vpop.f32.mrf.mxu0
  %v1470 = vadd.f32 %v1250, %v1469
  %v1471 = vpop.f32.mrf.mxu0
  %1472 = vdwg.mxu0
  %vm1473 = vcmask 130048
  %1474 = vst.msk [vmem:[%s11] sm:$0xff] %vm1473, %v1347
  %1475 = vst.msk [vmem:[%s11 + $0x8] sm:$0xff] %vm1473, %v1350
  %1476 = vst.msk [vmem:[%s11 + $0x10] sm:$0xff] %vm1473, %v1355
  %1477 = vst.msk [vmem:[%s11 + $0x18] sm:$0xff] %vm1473, %v1358
  %1478 = vst.msk [vmem:[%s11 + $0x20] sm:$0xff] %vm1473, %v1363
  %1479 = vst.msk [vmem:[%s11 + $0x28] sm:$0xff] %vm1473, %v1366
  %1480 = vst.msk [vmem:[%s11 + $0x30] sm:$0xff] %vm1473, %v1371
  %1481 = vst.msk [vmem:[%s11 + $0x38] sm:$0xff] %vm1473, %v1374
  %1482 = vst.msk [vmem:[%s11 + $0x40] sm:$0xff] %vm1473, %v1379
  %1483 = vst.msk [vmem:[%s11 + $0x48] sm:$0xff] %vm1473, %v1382
  %1484 = vst.msk [vmem:[%s11 + $0x50] sm:$0xff] %vm1473, %v1387
  %1485 = vst.msk [vmem:[%s11 + $0x58] sm:$0xff] %vm1473, %v1390
  %1486 = vst.msk [vmem:[%s11 + $0x60] sm:$0xff] %vm1473, %v1395
  %1487 = vst.msk [vmem:[%s11 + $0x68] sm:$0xff] %vm1473, %v1398
  %1488 = vst.msk [vmem:[%s11 + $0x70] sm:$0xff] %vm1473, %v1403
  %1489 = vst.msk [vmem:[%s11 + $0x78] sm:$0xff] %vm1473, %v1406
  %1490 = vst.msk [vmem:[%s11 + $0x80] sm:$0xff] %vm1473, %v1411
  %1491 = vst.msk [vmem:[%s11 + $0x88] sm:$0xff] %vm1473, %v1414
  %1492 = vst.msk [vmem:[%s11 + $0x90] sm:$0xff] %vm1473, %v1419
  %1493 = vst.msk [vmem:[%s11 + $0x98] sm:$0xff] %vm1473, %v1422
  %1494 = vst.msk [vmem:[%s11 + $0xa0] sm:$0xff] %vm1473, %v1427
  %1495 = vst.msk [vmem:[%s11 + $0xa8] sm:$0xff] %vm1473, %v1430
  %1496 = vst.msk [vmem:[%s11 + $0xb0] sm:$0xff] %vm1473, %v1435
  %1497 = vst.msk [vmem:[%s11 + $0xb8] sm:$0xff] %vm1473, %v1438
  %1498 = vst.msk [vmem:[%s11 + $0xc0] sm:$0xff] %vm1473, %v1443
  %1499 = vst.msk [vmem:[%s11 + $0xc8] sm:$0xff] %vm1473, %v1446
  %1500 = vst.msk [vmem:[%s11 + $0xd0] sm:$0xff] %vm1473, %v1451
  %1501 = vst.msk [vmem:[%s11 + $0xd8] sm:$0xff] %vm1473, %v1454
  %1502 = vst.msk [vmem:[%s11 + $0xe0] sm:$0xff] %vm1473, %v1459
  %1503 = vst.msk [vmem:[%s11 + $0xe8] sm:$0xff] %vm1473, %v1462
  %1504 = vst.msk [vmem:[%s11 + $0xf0] sm:$0xff] %vm1473, %v1467
  %1505 = vst.msk [vmem:[%s11 + $0xf8] sm:$0xff] %vm1473, %v1470
  // Predicated region
  $region46: #{simple_mlp1.1} parent=0 // pred_check
    _
  $region47: #{simple_mlp1.1} parent=0 // pred_check_branch
    %1507 = sbr.rel (0) target = $region49
  $region48: #{simple_mlp1.1} parent=0 // pred_region
    _
  $region49: #{simple_mlp1.1} parent=0 // pred_fallthru
    _
  // Predicated region
  $region50: #{simple_mlp1.1} parent=0 // pred_check
    _
  $region51: #{simple_mlp1.1} parent=0 // pred_check_branch
    %1509 = sbr.rel (0) target = $region53
  $region52: #{simple_mlp1.1} parent=0 // pred_region
    _
  $region53: #{simple_mlp1.1} parent=0 // pred_fallthru
    _

</llo_original>
